<compile_context>
chip_gen: v7x
topology: tpu7x:2x2x1
jax: 0.10.0
libtpu: 0.0.40
codegen_flags: <defaults>
</compile_context>

<pallas_src>
import functools
import math

import jax
import jax.numpy as jnp
from jax import lax
from jax.experimental import pallas as pl
from jax.experimental.pallas import tpu as pltpu

EPS = 1e-5                       # layer_norm_eps
_VMEM_LIMIT = 32 * 1024 * 1024   # safe on v5e/v6e/v7x


def _cp(grid_rank):
    return pltpu.CompilerParams(
        dimension_semantics=("parallel",) * grid_rank,
        vmem_limit_bytes=_VMEM_LIMIT,
    )


def _largest_tile(n, cap, mult):
    """Largest t <= cap with n % t == 0 and (t % mult == 0 or t == n)."""
    for t in range(min(cap, n), 0, -1):
        if n % t == 0 and (t % mult == 0 or t == n):
            return t
    return n


def _gelu_exact(x):
    # nn.GELU() default = exact erf-based GELU (kept in f32)
    return 0.5 * x * (1.0 + lax.erf(x * (1.0 / math.sqrt(2.0))))


def _recip(x):
    if hasattr(pl, "reciprocal"):
        return pl.reciprocal(x, approx=True)
    return 1.0 / x


def _layernorm_f32(x, g, b):
    mu = jnp.mean(x, axis=-1, keepdims=True)
    xc = x - mu
    var = jnp.mean(xc * xc, axis=-1, keepdims=True)
    return xc * lax.rsqrt(var + EPS) * g + b


# ----------------------------------------------------------------------------
# Kernel 0: token_embed(x) * x_num[..., None] + position_embed[:S]
# ----------------------------------------------------------------------------

def _embed_kernel(tok_ref, num_ref, pos_ref, o_ref):
    o_ref[0] = tok_ref[0] * num_ref[0] + pos_ref[...]


def embed_combine(tok, x_num, pos):
    B, S, D = tok.shape
    ts = _largest_tile(S, 256, 8)
    return pl.pallas_call(
        _embed_kernel,
        out_shape=jax.ShapeDtypeStruct((B, S, D), jnp.float32),
        grid=(B, S // ts),
        in_specs=[
            pl.BlockSpec((1, ts, D), lambda b, j: (b, j, 0)),
            pl.BlockSpec((1, ts, 1), lambda b, j: (b, j, 0)),
            pl.BlockSpec((ts, D), lambda b, j: (j, 0)),
        ],
        out_specs=pl.BlockSpec((1, ts, D), lambda b, j: (b, j, 0)),
        compiler_params=_cp(2),
    )(tok, x_num[..., None].astype(jnp.float32), pos)


# ----------------------------------------------------------------------------
# Kernel A: fused layernorm + linear (qkv projection)
# ----------------------------------------------------------------------------

def _ln_matmul_kernel(x_ref, g_ref, bln_ref, w_ref, b_ref, o_ref):
    x = x_ref[...].astype(jnp.float32)
    h = _layernorm_f32(x, g_ref[...], bln_ref[...])
    y = jnp.dot(h.astype(w_ref.dtype), w_ref[...],
                preferred_element_type=jnp.float32) + b_ref[...]
    o_ref[...] = y.astype(o_ref.dtype)


def ln_linear(x, g, bln, w, b):
    M, K = x.shape
    K2, N = w.shape
    assert K == K2
    tm = _largest_tile(M, 128, 8)
    tn = _largest_tile(N, 512, 128)
    return pl.pallas_call(
        _ln_matmul_kernel,
        out_shape=jax.ShapeDtypeStruct((M, N), jnp.float32),
        grid=(M // tm, N // tn),
        in_specs=[
            pl.BlockSpec((tm, K), lambda i, j: (i, 0)),
            pl.BlockSpec((1, K), lambda i, j: (0, 0)),
            pl.BlockSpec((1, K), lambda i, j: (0, 0)),
            pl.BlockSpec((K, tn), lambda i, j: (0, j)),
            pl.BlockSpec((1, tn), lambda i, j: (0, j)),
        ],
        out_specs=pl.BlockSpec((tm, tn), lambda i, j: (i, j)),
        compiler_params=_cp(2),
    )(x, g.reshape(1, K), bln.reshape(1, K), w, b.reshape(1, N))


# ----------------------------------------------------------------------------
# Kernel B: fused attention (all heads) + out_proj + residual, grid over batch
# ----------------------------------------------------------------------------

def _attn_block_kernel(qkv_ref, x_ref, wo_ref, bo_ref, o_ref, *, nhead, scale):
    qkv = qkv_ref[0].astype(jnp.float32)          # (S, 3D)
    D = qkv.shape[-1] // 3
    Dh = D // nhead
    y = None
    for h in range(nhead):                        # unrolled over heads
        qh = qkv[:, h * Dh:(h + 1) * Dh]
        kh = qkv[:, D + h * Dh:D + (h + 1) * Dh]
        vh = qkv[:, 2 * D + h * Dh:2 * D + (h + 1) * Dh]
        # scores = q @ k^T (contract head dim, no explicit transpose), bf16 MXU
        s = lax.dot_general(qh.astype(jnp.bfloat16), kh.astype(jnp.bfloat16),
                            (((1,), (1,)), ((), ())),
                            preferred_element_type=jnp.float32) * scale
        m = jnp.max(s, axis=-1, keepdims=True)
        p = jnp.exp(s - m)
        p = p * _recip(jnp.sum(p, axis=-1, keepdims=True))
        oh = jnp.dot(p.astype(jnp.bfloat16), vh.astype(jnp.bfloat16),
                     preferred_element_type=jnp.float32)          # (S, Dh)
        # out_proj applied per head-slice of W_out and summed == concat @ W_out
        part = jnp.dot(oh.astype(wo_ref.dtype), wo_ref[h * Dh:(h + 1) * Dh, :],
                       preferred_element_type=jnp.float32)        # (S, D)
        y = part if y is None else y + part
    y = y + bo_ref[...]
    o_ref[0] = (x_ref[0].astype(jnp.float32) + y).astype(o_ref.dtype)


def attention_block(qkv, x, w_out, b_out, nhead):
    """qkv: (B,S,3D), x (residual): (B,S,D) -> x + out_proj(attention(qkv))."""
    B, S, threeD = qkv.shape
    D = threeD // 3
    Dh = D // nhead
    kern = functools.partial(_attn_block_kernel, nhead=nhead,
                             scale=1.0 / math.sqrt(Dh))
    return pl.pallas_call(
        kern,
        out_shape=jax.ShapeDtypeStruct((B, S, D), jnp.float32),
        grid=(B,),
        in_specs=[
            pl.BlockSpec((1, S, threeD), lambda b: (b, 0, 0)),
            pl.BlockSpec((1, S, D), lambda b: (b, 0, 0)),
            pl.BlockSpec((D, D), lambda b: (0, 0)),
            pl.BlockSpec((1, D), lambda b: (0, 0)),
        ],
        out_specs=pl.BlockSpec((1, S, D), lambda b: (b, 0, 0)),
        compiler_params=_cp(1),
    )(qkv, x, w_out, b_out.reshape(1, D))


# ----------------------------------------------------------------------------
# Kernel C: fused [layernorm ->] linear -> GELU -> linear [-> +residual]
#   (used for the FFN block and for lm_head / num_head)
# ----------------------------------------------------------------------------

def _mlp_kernel(*refs, ln, residual):
    if ln:
        x_ref, g_ref, bln_ref, w1_ref, b1_ref, w2_ref, b2_ref, o_ref = refs
    else:
        x_ref, w1_ref, b1_ref, w2_ref, b2_ref, o_ref = refs
    x = x_ref[...].astype(jnp.float32)
    h = _layernorm_f32(x, g_ref[...], bln_ref[...]) if ln else x
    h1 = jnp.dot(h.astype(w1_ref.dtype), w1_ref[...],
                 preferred_element_type=jnp.float32) + b1_ref[...]
    h1 = _gelu_exact(h1)
    y = jnp.dot(h1.astype(w2_ref.dtype), w2_ref[...],
                preferred_element_type=jnp.float32) + b2_ref[...]
    if residual:
        y = y + x
    o_ref[...] = y.astype(o_ref.dtype)


def mlp_block(x, w1, b1, w2, b2, *, g=None, bln=None, residual=False):
    M, K = x.shape
    K1, F = w1.shape
    F2, N = w2.shape
    assert K == K1 and F == F2
    if residual:
        assert N == K
    ln = g is not None
    tm = _largest_tile(M, 128, 8)
    in_specs = [pl.BlockSpec((tm, K), lambda i: (i, 0))]
    args = [x]
    if ln:
        in_specs += [pl.BlockSpec((1, K), lambda i: (0, 0)),
                     pl.BlockSpec((1, K), lambda i: (0, 0))]
        args += [g.reshape(1, K), bln.reshape(1, K)]
    in_specs += [
        pl.BlockSpec((K, F), lambda i: (0, 0)),
        pl.BlockSpec((1, F), lambda i: (0, 0)),
        pl.BlockSpec((F, N), lambda i: (0, 0)),
        pl.BlockSpec((1, N), lambda i: (0, 0)),
    ]
    args += [w1, b1.reshape(1, F), w2, b2.reshape(1, N)]
    kern = functools.partial(_mlp_kernel, ln=ln, residual=residual)
    return pl.pallas_call(
        kern,
        out_shape=jax.ShapeDtypeStruct((M, N), jnp.float32),
        grid=(M // tm,),
        in_specs=in_specs,
        out_specs=pl.BlockSpec((tm, N), lambda i: (i, 0)),
        compiler_params=_cp(1),
    )(*args)


# ----------------------------------------------------------------------------
# Params (deterministic synthetic init), prep (bf16 weights, lane-dense heads)
# ----------------------------------------------------------------------------

def init_params(key, vocab_size, d_model, nhead, num_layers, dim_feedforward,
                context_length):
    n_keys = 8 + 8 * num_layers
    keys = iter(jax.random.split(key, n_keys))

    def nrm(shape, scale=0.02):
        return (scale * jax.random.normal(next(keys), shape)).astype(jnp.float32)

    p = {
        "token_embed": nrm((vocab_size, d_model), 1.0),
        "position_embed": nrm((context_length, d_model), 1.0),
    }
    layers = []
    for _ in range(num_layers):
        layers.append(dict(
            ln1_g=jnp.ones((d_model,), jnp.float32),
            ln1_b=jnp.zeros((d_model,), jnp.float32),
            w_in=nrm((d_model, 3 * d_model)),       # MHA in_proj (stored (in, out))
            b_in=nrm((3 * d_model,)),
            w_out=nrm((d_model, d_model)),          # MHA out_proj
            b_out=nrm((d_model,)),
            ln2_g=jnp.ones((d_model,), jnp.float32),
            ln2_b=jnp.zeros((d_model,), jnp.float32),
            w_ff1=nrm((d_model, dim_feedforward)),
            b_ff1=nrm((dim_feedforward,)),
            w_ff2=nrm((dim_feedforward, d_model)),
            b_ff2=nrm((d_model,)),
        ))
    p["layers"] = layers
    p["w_lm1"] = nrm((d_model, dim_feedforward))    # lm_head: bias=False
    p["w_lm2"] = nrm((dim_feedforward, vocab_size))
    p["w_num1"] = nrm((d_model, dim_feedforward))   # num_head: bias=True
    p["b_num1"] = nrm((dim_feedforward,))
    p["w_num2"] = nrm((dim_feedforward, 1))
    p["b_num2"] = nrm((1,))
    return p


def prepare_params(p, vocab_size, lane=128):
    """Cast matmul weights to bf16 (fast MXU path, half the weight DMA bytes)
    and zero-pad the two head output projections to lane-dense widths."""
    bf16 = jnp.bfloat16
    out = {"token_embed": p["token_embed"],
           "position_embed": p["position_embed"],
           "layers": []}
    for lp in p["layers"]:
        out["layers"].append(dict(
            ln1_g=lp["ln1_g"], ln1_b=lp["ln1_b"],
            w_in=lp["w_in"].astype(bf16), b_in=lp["b_in"],
            w_out=lp["w_out"].astype(bf16), b_out=lp["b_out"],
            ln2_g=lp["ln2_g"], ln2_b=lp["ln2_b"],
            w_ff1=lp["w_ff1"].astype(bf16), b_ff1=lp["b_ff1"],
            w_ff2=lp["w_ff2"].astype(bf16), b_ff2=lp["b_ff2"],
        ))
    F = p["w_lm1"].shape[1]
    vpad = ((vocab_size + lane - 1) // lane) * lane
    w_lm2 = jnp.zeros((F, vpad), jnp.float32).at[:, :vocab_size].set(p["w_lm2"])
    w_num2 = jnp.zeros((F, lane), jnp.float32).at[:, :1].set(p["w_num2"])
    b_num2 = jnp.zeros((lane,), jnp.float32).at[:1].set(p["b_num2"])
    out.update(
        w_lm1=p["w_lm1"].astype(bf16),
        b_lm1=jnp.zeros((F,), jnp.float32),          # transformer_bias=False
        w_lm2=w_lm2.astype(bf16),
        b_lm2=jnp.zeros((vpad,), jnp.float32),
        w_num1=p["w_num1"].astype(bf16),
        b_num1=p["b_num1"],
        w_num2=w_num2.astype(bf16),
        b_num2=b_num2,
    )
    return out


# ----------------------------------------------------------------------------
# Full forward (pre-norm TransformerEncoder, dropout = eval no-op)
# ----------------------------------------------------------------------------

def numformer_forward(params, x_tokens, x_num, *, nhead, vocab_size):
    B, S = x_tokens.shape
    D = params["token_embed"].shape[1]

    # TODO(synk): embedding gather stays in plain JAX (data-dependent gather).
    tok = jnp.take(params["token_embed"], x_tokens, axis=0)     # (B,S,D)
    pos = params["position_embed"][:S]                          # (S,D)
    h = embed_combine(tok, x_num, pos)                          # (B,S,D)

    xf = h.reshape(B * S, D)
    for lp in params["layers"]:
        # self-attention block: LN -> qkv proj (kernel A); attn+out_proj+res (kernel B)
        qkv = ln_linear(xf, lp["ln1_g"], lp["ln1_b"], lp["w_in"], lp["b_in"])
        xf = attention_block(qkv.reshape(B, S, 3 * D), xf.reshape(B, S, D),
                             lp["w_out"], lp["b_out"], nhead).reshape(B * S, D)
        # feed-forward block fused end-to-end (kernel C)
        xf = mlp_block(xf, lp["w_ff1"], lp["b_ff1"], lp["w_ff2"], lp["b_ff2"],
                       g=lp["ln2_g"], bln=lp["ln2_b"], residual=True)

    # heads: fused linear->GELU->linear, lane-dense padded outputs
    lm = mlp_block(xf, params["w_lm1"], params["b_lm1"],
                   params["w_lm2"], params["b_lm2"])
    nm = mlp_block(xf, params["w_num1"], params["b_num1"],
                   params["w_num2"], params["b_num2"])

    logit_preds = lm[:, :vocab_size].reshape(B, S, vocab_size)
    num_preds = nm[:, :1].reshape(B, S, 1)
    return logit_preds, num_preds


if __name__ == "__main__":
    vocab_size = 32
    d_model = 64
    nhead = 4
    num_layers = 2
    dim_feedforward = 128
    context_length = 16
    B, S = 2, 8

    root = jax.random.PRNGKey(0)
    k_params, k_tok, k_num = jax.random.split(root, 3)

    raw = init_params(k_params, vocab_size, d_model, nhead, num_layers,
                      dim_feedforward, context_length)
    params = prepare_params(raw, vocab_size)

    x = jax.random.randint(k_tok, (B, S), 0, vocab_size, dtype=jnp.int32)
    x_num = jax.random.uniform(k_num, (B, S), dtype=jnp.float32,
                               minval=0.5, maxval=2.0)

    fwd = jax.jit(functools.partial(numformer_forward, nhead=nhead,
                                    vocab_size=vocab_size))
    logit_preds, num_preds = fwd(params, x, x_num)
    jax.block_until_ready((logit_preds, num_preds))

    assert logit_preds.shape == (B, S, vocab_size)
    assert num_preds.shape == (B, S, 1)
    assert bool(jnp.all(jnp.isfinite(logit_preds)))
    assert bool(jnp.all(jnp.isfinite(num_preds)))
    print("KERNEL_OK")
</pallas_src>

<mosaic_0001>
module attributes {stable_mosaic.version = 11 : i64} {
  func.func @_ln_matmul_kernel(%arg0: i32, %arg1: i32, %arg2: memref<16x64xf32, #tpu.memory_space<vmem>>, %arg3: memref<1x64xf32, #tpu.memory_space<vmem>>, %arg4: memref<1x64xf32, #tpu.memory_space<vmem>>, %arg5: memref<64x192xbf16, #tpu.memory_space<vmem>>, %arg6: memref<1x192xf32, #tpu.memory_space<vmem>>, %arg7: memref<16x192xf32, #tpu.memory_space<vmem>>) attributes {dimension_semantics = [#tpu.dimension_semantics<parallel>, #tpu.dimension_semantics<parallel>], iteration_bounds = array<i64: 1, 1>, scalar_prefetch = 0 : i64, scratch_operands = 0 : i64, tpu.core_type = #tpu.core_type<tc>, window_params = [{transform_indices = @transform_0, window_bounds = array<i64: 16, 64>}, {pipeline_mode = #tpu.pipeline_mode<synchronous>, transform_indices = @transform_1, window_bounds = array<i64: 1, 64>}, {pipeline_mode = #tpu.pipeline_mode<synchronous>, transform_indices = @transform_2, window_bounds = array<i64: 1, 64>}, {transform_indices = @transform_3, window_bounds = array<i64: 64, 192>}, {transform_indices = @transform_4, window_bounds = array<i64: 1, 192>}, {transform_indices = @transform_5, window_bounds = array<i64: 16, 192>}]} {
    %c0 = arith.constant 0 : index
    %c0_0 = arith.constant 0 : index
    %0 = vector.load %arg2[%c0, %c0_0] : memref<16x64xf32, #tpu.memory_space<vmem>>, vector<16x64xf32>
    %c0_1 = arith.constant 0 : index
    %c0_2 = arith.constant 0 : index
    %1 = vector.load %arg3[%c0_1, %c0_2] : memref<1x64xf32, #tpu.memory_space<vmem>>, vector<1x64xf32>
    %c0_3 = arith.constant 0 : index
    %c0_4 = arith.constant 0 : index
    %2 = vector.load %arg4[%c0_3, %c0_4] : memref<1x64xf32, #tpu.memory_space<vmem>>, vector<1x64xf32>
    %cst = arith.constant dense<0.000000e+00> : vector<16xf32>
    %3 = vector.multi_reduction <add>, %0, %cst [1] : vector<16x64xf32> to vector<16xf32>
    %4 = vector.shape_cast %3 : vector<16xf32> to vector<16x1xf32>
    %cst_5 = arith.constant 6.400000e+01 : f32
    %5 = vector.broadcast %cst_5 : f32 to vector<16x1xf32>
    %6 = arith.divf %4, %5 : vector<16x1xf32>
    %7 = vector.broadcast %6 : vector<16x1xf32> to vector<16x64xf32>
    %8 = arith.subf %0, %7 : vector<16x64xf32>
    %9 = arith.mulf %8, %8 : vector<16x64xf32>
    %cst_6 = arith.constant dense<0.000000e+00> : vector<16xf32>
    %10 = vector.multi_reduction <add>, %9, %cst_6 [1] : vector<16x64xf32> to vector<16xf32>
    %11 = vector.shape_cast %10 : vector<16xf32> to vector<16x1xf32>
    %cst_7 = arith.constant 6.400000e+01 : f32
    %12 = vector.broadcast %cst_7 : f32 to vector<16x1xf32>
    %13 = arith.divf %11, %12 : vector<16x1xf32>
    %cst_8 = arith.constant 9.99999974E-6 : f32
    %14 = vector.broadcast %cst_8 : f32 to vector<16x1xf32>
    %15 = arith.addf %13, %14 : vector<16x1xf32>
    %16 = math.rsqrt %15 : vector<16x1xf32>
    %17 = vector.broadcast %16 : vector<16x1xf32> to vector<16x64xf32>
    %18 = arith.mulf %8, %17 : vector<16x64xf32>
    %19 = vector.broadcast %1 : vector<1x64xf32> to vector<16x64xf32>
    %20 = arith.mulf %18, %19 : vector<16x64xf32>
    %21 = vector.broadcast %2 : vector<1x64xf32> to vector<16x64xf32>
    %22 = arith.addf %20, %21 : vector<16x64xf32>
    %23 = arith.truncf %22 : vector<16x64xf32> to vector<16x64xbf16>
    %c0_9 = arith.constant 0 : index
    %c0_10 = arith.constant 0 : index
    %24 = vector.load %arg5[%c0_9, %c0_10] : memref<64x192xbf16, #tpu.memory_space<vmem>>, vector<64x192xbf16>
    %cst_11 = arith.constant dense<0.000000e+00> : vector<16x192xf32>
    %25 = tpu.matmul %23, %24, %cst_11 {dimension_numbers = #tpu.dot_dimension_numbers<[1], [0], [0], [1], [0, 0, 1, 1], [], []>} : vector<16x64xbf16>, vector<64x192xbf16>, vector<16x192xf32> -> vector<16x192xf32>
    %c0_12 = arith.constant 0 : index
    %c0_13 = arith.constant 0 : index
    %26 = vector.load %arg6[%c0_12, %c0_13] : memref<1x192xf32, #tpu.memory_space<vmem>>, vector<1x192xf32>
    %27 = vector.broadcast %26 : vector<1x192xf32> to vector<16x192xf32>
    %28 = arith.addf %25, %27 : vector<16x192xf32>
    %c0_14 = arith.constant 0 : index
    %c0_15 = arith.constant 0 : index
    %29 = vector.load %arg7[%c0_14, %c0_15] : memref<16x192xf32, #tpu.memory_space<vmem>>, vector<16x192xf32>
    tpu.vector_store %arg7[%c0_14, %c0_15], %28 {strides = array<i32>} : memref<16x192xf32, #tpu.memory_space<vmem>>, vector<16x192xf32>,
    return
  }
  func.func @transform_0(%arg0: i32, %arg1: i32) -> (i32, i32) {
    %c0_i32 = arith.constant 0 : i32
    %c0_i32_0 = arith.constant 0 : i32
    return %arg0, %c0_i32 : i32, i32
  }
  func.func @transform_1(%arg0: i32, %arg1: i32) -> (i32, i32) {
    %c0_i32 = arith.constant 0 : i32
    %c0_i32_0 = arith.constant 0 : i32
    %c0_i32_1 = arith.constant 0 : i32
    return %c0_i32, %c0_i32_0 : i32, i32
  }
  func.func @transform_2(%arg0: i32, %arg1: i32) -> (i32, i32) {
    %c0_i32 = arith.constant 0 : i32
    %c0_i32_0 = arith.constant 0 : i32
    %c0_i32_1 = arith.constant 0 : i32
    return %c0_i32, %c0_i32_0 : i32, i32
  }
  func.func @transform_3(%arg0: i32, %arg1: i32) -> (i32, i32) {
    %c0_i32 = arith.constant 0 : i32
    %c0_i32_0 = arith.constant 0 : i32
    return %c0_i32, %arg1 : i32, i32
  }
  func.func @transform_4(%arg0: i32, %arg1: i32) -> (i32, i32) {
    %c0_i32 = arith.constant 0 : i32
    %c0_i32_0 = arith.constant 0 : i32
    return %c0_i32, %arg1 : i32, i32
  }
  func.func @transform_5(%arg0: i32, %arg1: i32) -> (i32, i32) {
    %c0_i32 = arith.constant 0 : i32
    return %arg0, %arg1 : i32, i32
  }
}

module attributes {stable_mosaic.version = 11 : i64} {
  func.func @_embed_kernel(%arg0: i32, %arg1: i32, %arg2: memref<1x8x64xf32, #tpu.memory_space<vmem>>, %arg3: memref<1x8x1xf32, #tpu.memory_space<vmem>>, %arg4: memref<8x64xf32, #tpu.memory_space<vmem>>, %arg5: memref<1x8x64xf32, #tpu.memory_space<vmem>>) attributes {dimension_semantics = [#tpu.dimension_semantics<parallel>, #tpu.dimension_semantics<parallel>], iteration_bounds = array<i64: 2, 1>, scalar_prefetch = 0 : i64, scratch_operands = 0 : i64, tpu.core_type = #tpu.core_type<tc>, window_params = [{transform_indices = @transform_0, window_bounds = array<i64: 1, 8, 64>}, {transform_indices = @transform_1, window_bounds = array<i64: 1, 8, 1>}, {transform_indices = @transform_2, window_bounds = array<i64: 8, 64>}, {transform_indices = @transform_3, window_bounds = array<i64: 1, 8, 64>}]} {
    %c0 = arith.constant 0 : index
    %c0_0 = arith.constant 0 : index
    %c0_1 = arith.constant 0 : index
    %0 = vector.load %arg2[%c0, %c0_0, %c0_1] : memref<1x8x64xf32, #tpu.memory_space<vmem>>, vector<1x8x64xf32>
    %1 = vector.shape_cast %0 : vector<1x8x64xf32> to vector<8x64xf32>
    %c0_2 = arith.constant 0 : index
    %c0_3 = arith.constant 0 : index
    %c0_4 = arith.constant 0 : index
    %2 = vector.load %arg3[%c0_2, %c0_3, %c0_4] : memref<1x8x1xf32, #tpu.memory_space<vmem>>, vector<1x8x1xf32>
    %3 = vector.shape_cast %2 : vector<1x8x1xf32> to vector<8x1xf32>
    %4 = vector.broadcast %3 : vector<8x1xf32> to vector<8x64xf32>
    %5 = arith.mulf %1, %4 : vector<8x64xf32>
    %c0_5 = arith.constant 0 : index
    %c0_6 = arith.constant 0 : index
    %6 = vector.load %arg4[%c0_5, %c0_6] : memref<8x64xf32, #tpu.memory_space<vmem>>, vector<8x64xf32>
    %7 = arith.addf %5, %6 : vector<8x64xf32>
    %c0_7 = arith.constant 0 : index
    %c0_8 = arith.constant 0 : index
    %c0_9 = arith.constant 0 : index
    %8 = vector.load %arg5[%c0_7, %c0_8, %c0_9] : memref<1x8x64xf32, #tpu.memory_space<vmem>>, vector<1x8x64xf32>
    %9 = vector.shape_cast %8 : vector<1x8x64xf32> to vector<8x64xf32>
    %10 = vector.shape_cast %7 : vector<8x64xf32> to vector<1x8x64xf32>
    tpu.vector_store %arg5[%c0_7, %c0_8, %c0_9], %10 {strides = array<i32>} : memref<1x8x64xf32, #tpu.memory_space<vmem>>, vector<1x8x64xf32>,
    return
  }
  func.func @transform_0(%arg0: i32, %arg1: i32) -> (i32, i32, i32) {
    %c0_i32 = arith.constant 0 : i32
    %c0_i32_0 = arith.constant 0 : i32
    return %arg0, %arg1, %c0_i32 : i32, i32, i32
  }
  func.func @transform_1(%arg0: i32, %arg1: i32) -> (i32, i32, i32) {
    %c0_i32 = arith.constant 0 : i32
    %c0_i32_0 = arith.constant 0 : i32
    return %arg0, %arg1, %c0_i32 : i32, i32, i32
  }
  func.func @transform_2(%arg0: i32, %arg1: i32) -> (i32, i32) {
    %c0_i32 = arith.constant 0 : i32
    %c0_i32_0 = arith.constant 0 : i32
    return %arg1, %c0_i32 : i32, i32
  }
  func.func @transform_3(%arg0: i32, %arg1: i32) -> (i32, i32, i32) {
    %c0_i32 = arith.constant 0 : i32
    %c0_i32_0 = arith.constant 0 : i32
    return %arg0, %arg1, %c0_i32 : i32, i32, i32
  }
}

module attributes {stable_mosaic.version = 11 : i64} {
  func.func @_attn_block_kernel(%arg0: i32, %arg1: memref<1x8x192xf32, #tpu.memory_space<vmem>>, %arg2: memref<1x8x64xf32, #tpu.memory_space<vmem>>, %arg3: memref<64x64xbf16, #tpu.memory_space<vmem>>, %arg4: memref<1x64xf32, #tpu.memory_space<vmem>>, %arg5: memref<1x8x64xf32, #tpu.memory_space<vmem>>) attributes {dimension_semantics = [#tpu.dimension_semantics<parallel>], iteration_bounds = array<i64: 2>, scalar_prefetch = 0 : i64, scratch_operands = 0 : i64, tpu.core_type = #tpu.core_type<tc>, window_params = [{transform_indices = @transform_0, window_bounds = array<i64: 1, 8, 192>}, {transform_indices = @transform_1, window_bounds = array<i64: 1, 8, 64>}, {pipeline_mode = #tpu.pipeline_mode<synchronous>, transform_indices = @transform_2, window_bounds = array<i64: 64, 64>}, {pipeline_mode = #tpu.pipeline_mode<synchronous>, transform_indices = @transform_3, window_bounds = array<i64: 1, 64>}, {transform_indices = @transform_4, window_bounds = array<i64: 1, 8, 64>}]} {
    %c0 = arith.constant 0 : index
    %c0_0 = arith.constant 0 : index
    %c0_1 = arith.constant 0 : index
    %0 = vector.load %arg1[%c0, %c0_0, %c0_1] : memref<1x8x192xf32, #tpu.memory_space<vmem>>, vector<1x8x192xf32>
    %1 = vector.shape_cast %0 : vector<1x8x192xf32> to vector<8x192xf32>
    %2 = vector.extract_strided_slice %1 {offsets = [0, 0], sizes = [8, 16], strides = [1, 1]} : vector<8x192xf32> to vector<8x16xf32>
    %3 = vector.extract_strided_slice %1 {offsets = [0, 64], sizes = [8, 16], strides = [1, 1]} : vector<8x192xf32> to vector<8x16xf32>
    %4 = vector.extract_strided_slice %1 {offsets = [0, 128], sizes = [8, 16], strides = [1, 1]} : vector<8x192xf32> to vector<8x16xf32>
    %5 = arith.truncf %2 : vector<8x16xf32> to vector<8x16xbf16>
    %6 = arith.truncf %3 : vector<8x16xf32> to vector<8x16xbf16>
    %cst = arith.constant dense<0.000000e+00> : vector<8x8xf32>
    %7 = tpu.matmul %5, %6, %cst {dimension_numbers = #tpu.dot_dimension_numbers<[1], [1], [0], [0], [0, 0, 1, 0], [], []>} : vector<8x16xbf16>, vector<8x16xbf16>, vector<8x8xf32> -> vector<8x8xf32>
    %cst_2 = arith.constant 2.500000e-01 : f32
    %8 = vector.broadcast %cst_2 : f32 to vector<8x8xf32>
    %9 = arith.mulf %7, %8 : vector<8x8xf32>
    %cst_3 = arith.constant dense<0xFF800000> : vector<8xf32>
    %10 = vector.multi_reduction <maximumf>, %9, %cst_3 [1] : vector<8x8xf32> to vector<8xf32>
    %11 = vector.shape_cast %10 : vector<8xf32> to vector<8x1xf32>
    %12 = vector.broadcast %11 : vector<8x1xf32> to vector<8x8xf32>
    %13 = arith.subf %9, %12 : vector<8x8xf32>
    %14 = math.exp %13 : vector<8x8xf32>
    %cst_4 = arith.constant dense<0.000000e+00> : vector<8xf32>
    %15 = vector.multi_reduction <add>, %14, %cst_4 [1] : vector<8x8xf32> to vector<8xf32>
    %16 = vector.shape_cast %15 : vector<8xf32> to vector<8x1xf32>
    %17 = tpu.reciprocal %16 {approx = true} : vector<8x1xf32> -> vector<8x1xf32>
    %18 = vector.broadcast %17 : vector<8x1xf32> to vector<8x8xf32>
    %19 = arith.mulf %14, %18 : vector<8x8xf32>
    %20 = arith.truncf %19 : vector<8x8xf32> to vector<8x8xbf16>
    %21 = arith.truncf %4 : vector<8x16xf32> to vector<8x16xbf16>
    %cst_5 = arith.constant dense<0.000000e+00> : vector<8x16xf32>
    %22 = tpu.matmul %20, %21, %cst_5 {dimension_numbers = #tpu.dot_dimension_numbers<[1], [0], [0], [1], [0, 0, 1, 1], [], []>} : vector<8x8xbf16>, vector<8x16xbf16>, vector<8x16xf32> -> vector<8x16xf32>
    %23 = arith.truncf %22 : vector<8x16xf32> to vector<8x16xbf16>
    %c0_6 = arith.constant 0 : index
    %c0_7 = arith.constant 0 : index
    %24 = vector.load %arg3[%c0_6, %c0_7] : memref<64x64xbf16, #tpu.memory_space<vmem>>, vector<16x64xbf16>
    %cst_8 = arith.constant dense<0.000000e+00> : vector<8x64xf32>
    %25 = tpu.matmul %23, %24, %cst_8 {dimension_numbers = #tpu.dot_dimension_numbers<[1], [0], [0], [1], [0, 0, 1, 1], [], []>} : vector<8x16xbf16>, vector<16x64xbf16>, vector<8x64xf32> -> vector<8x64xf32>
    %26 = vector.extract_strided_slice %1 {offsets = [0, 16], sizes = [8, 16], strides = [1, 1]} : vector<8x192xf32> to vector<8x16xf32>
    %27 = vector.extract_strided_slice %1 {offsets = [0, 80], sizes = [8, 16], strides = [1, 1]} : vector<8x192xf32> to vector<8x16xf32>
    %28 = vector.extract_strided_slice %1 {offsets = [0, 144], sizes = [8, 16], strides = [1, 1]} : vector<8x192xf32> to vector<8x16xf32>
    %29 = arith.truncf %26 : vector<8x16xf32> to vector<8x16xbf16>
    %30 = arith.truncf %27 : vector<8x16xf32> to vector<8x16xbf16>
    %cst_9 = arith.constant dense<0.000000e+00> : vector<8x8xf32>
    %31 = tpu.matmul %29, %30, %cst_9 {dimension_numbers = #tpu.dot_dimension_numbers<[1], [1], [0], [0], [0, 0, 1, 0], [], []>} : vector<8x16xbf16>, vector<8x16xbf16>, vector<8x8xf32> -> vector<8x8xf32>
    %cst_10 = arith.constant 2.500000e-01 : f32
    %32 = vector.broadcast %cst_10 : f32 to vector<8x8xf32>
    %33 = arith.mulf %31, %32 : vector<8x8xf32>
    %cst_11 = arith.constant dense<0xFF800000> : vector<8xf32>
    %34 = vector.multi_reduction <maximumf>, %33, %cst_11 [1] : vector<8x8xf32> to vector<8xf32>
    %35 = vector.shape_cast %34 : vector<8xf32> to vector<8x1xf32>
    %36 = vector.broadcast %35 : vector<8x1xf32> to vector<8x8xf32>
    %37 = arith.subf %33, %36 : vector<8x8xf32>
    %38 = math.exp %37 : vector<8x8xf32>
    %cst_12 = arith.constant dense<0.000000e+00> : vector<8xf32>
    %39 = vector.multi_reduction <add>, %38, %cst_12 [1] : vector<8x8xf32> to vector<8xf32>
    %40 = vector.shape_cast %39 : vector<8xf32> to vector<8x1xf32>
    %41 = tpu.reciprocal %40 {approx = true} : vector<8x1xf32> -> vector<8x1xf32>
    %42 = vector.broadcast %41 : vector<8x1xf32> to vector<8x8xf32>
    %43 = arith.mulf %38, %42 : vector<8x8xf32>
    %44 = arith.truncf %43 : vector<8x8xf32> to vector<8x8xbf16>
    %45 = arith.truncf %28 : vector<8x16xf32> to vector<8x16xbf16>
    %cst_13 = arith.constant dense<0.000000e+00> : vector<8x16xf32>
    %46 = tpu.matmul %44, %45, %cst_13 {dimension_numbers = #tpu.dot_dimension_numbers<[1], [0], [0], [1], [0, 0, 1, 1], [], []>} : vector<8x8xbf16>, vector<8x16xbf16>, vector<8x16xf32> -> vector<8x16xf32>
    %47 = arith.truncf %46 : vector<8x16xf32> to vector<8x16xbf16>
    %c16 = arith.constant 16 : index
    %c0_14 = arith.constant 0 : index
    %48 = vector.load %arg3[%c16, %c0_14] : memref<64x64xbf16, #tpu.memory_space<vmem>>, vector<16x64xbf16>
    %cst_15 = arith.constant dense<0.000000e+00> : vector<8x64xf32>
    %49 = tpu.matmul %47, %48, %cst_15 {dimension_numbers = #tpu.dot_dimension_numbers<[1], [0], [0], [1], [0, 0, 1, 1], [], []>} : vector<8x16xbf16>, vector<16x64xbf16>, vector<8x64xf32> -> vector<8x64xf32>
    %50 = arith.addf %25, %49 : vector<8x64xf32>
    %51 = vector.extract_strided_slice %1 {offsets = [0, 32], sizes = [8, 16], strides = [1, 1]} : vector<8x192xf32> to vector<8x16xf32>
    %52 = vector.extract_strided_slice %1 {offsets = [0, 96], sizes = [8, 16], strides = [1, 1]} : vector<8x192xf32> to vector<8x16xf32>
    %53 = vector.extract_strided_slice %1 {offsets = [0, 160], sizes = [8, 16], strides = [1, 1]} : vector<8x192xf32> to vector<8x16xf32>
    %54 = arith.truncf %51 : vector<8x16xf32> to vector<8x16xbf16>
    %55 = arith.truncf %52 : vector<8x16xf32> to vector<8x16xbf16>
    %cst_16 = arith.constant dense<0.000000e+00> : vector<8x8xf32>
    %56 = tpu.matmul %54, %55, %cst_16 {dimension_numbers = #tpu.dot_dimension_numbers<[1], [1], [0], [0], [0, 0, 1, 0], [], []>} : vector<8x16xbf16>, vector<8x16xbf16>, vector<8x8xf32> -> vector<8x8xf32>
    %cst_17 = arith.constant 2.500000e-01 : f32
    %57 = vector.broadcast %cst_17 : f32 to vector<8x8xf32>
    %58 = arith.mulf %56, %57 : vector<8x8xf32>
    %cst_18 = arith.constant dense<0xFF800000> : vector<8xf32>
    %59 = vector.multi_reduction <maximumf>, %58, %cst_18 [1] : vector<8x8xf32> to vector<8xf32>
    %60 = vector.shape_cast %59 : vector<8xf32> to vector<8x1xf32>
    %61 = vector.broadcast %60 : vector<8x1xf32> to vector<8x8xf32>
    %62 = arith.subf %58, %61 : vector<8x8xf32>
    %63 = math.exp %62 : vector<8x8xf32>
    %cst_19 = arith.constant dense<0.000000e+00> : vector<8xf32>
    %64 = vector.multi_reduction <add>, %63, %cst_19 [1] : vector<8x8xf32> to vector<8xf32>
    %65 = vector.shape_cast %64 : vector<8xf32> to vector<8x1xf32>
    %66 = tpu.reciprocal %65 {approx = true} : vector<8x1xf32> -> vector<8x1xf32>
    %67 = vector.broadcast %66 : vector<8x1xf32> to vector<8x8xf32>
    %68 = arith.mulf %63, %67 : vector<8x8xf32>
    %69 = arith.truncf %68 : vector<8x8xf32> to vector<8x8xbf16>
    %70 = arith.truncf %53 : vector<8x16xf32> to vector<8x16xbf16>
    %cst_20 = arith.constant dense<0.000000e+00> : vector<8x16xf32>
    %71 = tpu.matmul %69, %70, %cst_20 {dimension_numbers = #tpu.dot_dimension_numbers<[1], [0], [0], [1], [0, 0, 1, 1], [], []>} : vector<8x8xbf16>, vector<8x16xbf16>, vector<8x16xf32> -> vector<8x16xf32>
    %72 = arith.truncf %71 : vector<8x16xf32> to vector<8x16xbf16>
    %c32 = arith.constant 32 : index
    %c0_21 = arith.constant 0 : index
    %73 = vector.load %arg3[%c32, %c0_21] : memref<64x64xbf16, #tpu.memory_space<vmem>>, vector<16x64xbf16>
    %cst_22 = arith.constant dense<0.000000e+00> : vector<8x64xf32>
    %74 = tpu.matmul %72, %73, %cst_22 {dimension_numbers = #tpu.dot_dimension_numbers<[1], [0], [0], [1], [0, 0, 1, 1], [], []>} : vector<8x16xbf16>, vector<16x64xbf16>, vector<8x64xf32> -> vector<8x64xf32>
    %75 = arith.addf %50, %74 : vector<8x64xf32>
    %76 = vector.extract_strided_slice %1 {offsets = [0, 48], sizes = [8, 16], strides = [1, 1]} : vector<8x192xf32> to vector<8x16xf32>
    %77 = vector.extract_strided_slice %1 {offsets = [0, 112], sizes = [8, 16], strides = [1, 1]} : vector<8x192xf32> to vector<8x16xf32>
    %78 = vector.extract_strided_slice %1 {offsets = [0, 176], sizes = [8, 16], strides = [1, 1]} : vector<8x192xf32> to vector<8x16xf32>
    %79 = arith.truncf %76 : vector<8x16xf32> to vector<8x16xbf16>
    %80 = arith.truncf %77 : vector<8x16xf32> to vector<8x16xbf16>
    %cst_23 = arith.constant dense<0.000000e+00> : vector<8x8xf32>
    %81 = tpu.matmul %79, %80, %cst_23 {dimension_numbers = #tpu.dot_dimension_numbers<[1], [1], [0], [0], [0, 0, 1, 0], [], []>} : vector<8x16xbf16>, vector<8x16xbf16>, vector<8x8xf32> -> vector<8x8xf32>
    %cst_24 = arith.constant 2.500000e-01 : f32
    %82 = vector.broadcast %cst_24 : f32 to vector<8x8xf32>
    %83 = arith.mulf %81, %82 : vector<8x8xf32>
    %cst_25 = arith.constant dense<0xFF800000> : vector<8xf32>
    %84 = vector.multi_reduction <maximumf>, %83, %cst_25 [1] : vector<8x8xf32> to vector<8xf32>
    %85 = vector.shape_cast %84 : vector<8xf32> to vector<8x1xf32>
    %86 = vector.broadcast %85 : vector<8x1xf32> to vector<8x8xf32>
    %87 = arith.subf %83, %86 : vector<8x8xf32>
    %88 = math.exp %87 : vector<8x8xf32>
    %cst_26 = arith.constant dense<0.000000e+00> : vector<8xf32>
    %89 = vector.multi_reduction <add>, %88, %cst_26 [1] : vector<8x8xf32> to vector<8xf32>
    %90 = vector.shape_cast %89 : vector<8xf32> to vector<8x1xf32>
    %91 = tpu.reciprocal %90 {approx = true} : vector<8x1xf32> -> vector<8x1xf32>
    %92 = vector.broadcast %91 : vector<8x1xf32> to vector<8x8xf32>
    %93 = arith.mulf %88, %92 : vector<8x8xf32>
    %94 = arith.truncf %93 : vector<8x8xf32> to vector<8x8xbf16>
    %95 = arith.truncf %78 : vector<8x16xf32> to vector<8x16xbf16>
    %cst_27 = arith.constant dense<0.000000e+00> : vector<8x16xf32>
    %96 = tpu.matmul %94, %95, %cst_27 {dimension_numbers = #tpu.dot_dimension_numbers<[1], [0], [0], [1], [0, 0, 1, 1], [], []>} : vector<8x8xbf16>, vector<8x16xbf16>, vector<8x16xf32> -> vector<8x16xf32>
    %97 = arith.truncf %96 : vector<8x16xf32> to vector<8x16xbf16>
    %c48 = arith.constant 48 : index
    %c0_28 = arith.constant 0 : index
    %98 = vector.load %arg3[%c48, %c0_28] : memref<64x64xbf16, #tpu.memory_space<vmem>>, vector<16x64xbf16>
    %cst_29 = arith.constant dense<0.000000e+00> : vector<8x64xf32>
    %99 = tpu.matmul %97, %98, %cst_29 {dimension_numbers = #tpu.dot_dimension_numbers<[1], [0], [0], [1], [0, 0, 1, 1], [], []>} : vector<8x16xbf16>, vector<16x64xbf16>, vector<8x64xf32> -> vector<8x64xf32>
    %100 = arith.addf %75, %99 : vector<8x64xf32>
    %c0_30 = arith.constant 0 : index
    %c0_31 = arith.constant 0 : index
    %101 = vector.load %arg4[%c0_30, %c0_31] : memref<1x64xf32, #tpu.memory_space<vmem>>, vector<1x64xf32>
    %102 = vector.broadcast %101 : vector<1x64xf32> to vector<8x64xf32>
    %103 = arith.addf %100, %102 : vector<8x64xf32>
    %c0_32 = arith.constant 0 : index
    %c0_33 = arith.constant 0 : index
    %c0_34 = arith.constant 0 : index
    %104 = vector.load %arg2[%c0_32, %c0_33, %c0_34] : memref<1x8x64xf32, #tpu.memory_space<vmem>>, vector<1x8x64xf32>
    %105 = vector.shape_cast %104 : vector<1x8x64xf32> to vector<8x64xf32>
    %106 = arith.addf %105, %103 : vector<8x64xf32>
    %c0_35 = arith.constant 0 : index
    %c0_36 = arith.constant 0 : index
    %c0_37 = arith.constant 0 : index
    %107 = vector.load %arg5[%c0_35, %c0_36, %c0_37] : memref<1x8x64xf32, #tpu.memory_space<vmem>>, vector<1x8x64xf32>
    %108 = vector.shape_cast %107 : vector<1x8x64xf32> to vector<8x64xf32>
    %109 = vector.shape_cast %106 : vector<8x64xf32> to vector<1x8x64xf32>
    tpu.vector_store %arg5[%c0_35, %c0_36, %c0_37], %109 {strides = array<i32>} : memref<1x8x64xf32, #tpu.memory_space<vmem>>, vector<1x8x64xf32>,
    return
  }
  func.func @transform_0(%arg0: i32) -> (i32, i32, i32) {
    %c0_i32 = arith.constant 0 : i32
    %c0_i32_0 = arith.constant 0 : i32
    %c0_i32_1 = arith.constant 0 : i32
    return %arg0, %c0_i32, %c0_i32_0 : i32, i32, i32
  }
  func.func @transform_1(%arg0: i32) -> (i32, i32, i32) {
    %c0_i32 = arith.constant 0 : i32
    %c0_i32_0 = arith.constant 0 : i32
    %c0_i32_1 = arith.constant 0 : i32
    return %arg0, %c0_i32, %c0_i32_0 : i32, i32, i32
  }
  func.func @transform_2(%arg0: i32) -> (i32, i32) {
    %c0_i32 = arith.constant 0 : i32
    %c0_i32_0 = arith.constant 0 : i32
    %c0_i32_1 = arith.constant 0 : i32
    return %c0_i32, %c0_i32_0 : i32, i32
  }
  func.func @transform_3(%arg0: i32) -> (i32, i32) {
    %c0_i32 = arith.constant 0 : i32
    %c0_i32_0 = arith.constant 0 : i32
    %c0_i32_1 = arith.constant 0 : i32
    return %c0_i32, %c0_i32_0 : i32, i32
  }
  func.func @transform_4(%arg0: i32) -> (i32, i32, i32) {
    %c0_i32 = arith.constant 0 : i32
    %c0_i32_0 = arith.constant 0 : i32
    %c0_i32_1 = arith.constant 0 : i32
    return %arg0, %c0_i32, %c0_i32_0 : i32, i32, i32
  }
}

module attributes {stable_mosaic.version = 11 : i64} {
  func.func @_mlp_kernel(%arg0: i32, %arg1: memref<16x64xf32, #tpu.memory_space<vmem>>, %arg2: memref<1x64xf32, #tpu.memory_space<vmem>>, %arg3: memref<1x64xf32, #tpu.memory_space<vmem>>, %arg4: memref<64x128xbf16, #tpu.memory_space<vmem>>, %arg5: memref<1x128xf32, #tpu.memory_space<vmem>>, %arg6: memref<128x64xbf16, #tpu.memory_space<vmem>>, %arg7: memref<1x64xf32, #tpu.memory_space<vmem>>, %arg8: memref<16x64xf32, #tpu.memory_space<vmem>>) attributes {dimension_semantics = [#tpu.dimension_semantics<parallel>], iteration_bounds = array<i64: 1>, scalar_prefetch = 0 : i64, scratch_operands = 0 : i64, tpu.core_type = #tpu.core_type<tc>, window_params = [{transform_indices = @transform_0, window_bounds = array<i64: 16, 64>}, {pipeline_mode = #tpu.pipeline_mode<synchronous>, transform_indices = @transform_1, window_bounds = array<i64: 1, 64>}, {pipeline_mode = #tpu.pipeline_mode<synchronous>, transform_indices = @transform_2, window_bounds = array<i64: 1, 64>}, {pipeline_mode = #tpu.pipeline_mode<synchronous>, transform_indices = @transform_3, window_bounds = array<i64: 64, 128>}, {pipeline_mode = #tpu.pipeline_mode<synchronous>, transform_indices = @transform_4, window_bounds = array<i64: 1, 128>}, {pipeline_mode = #tpu.pipeline_mode<synchronous>, transform_indices = @transform_5, window_bounds = array<i64: 128, 64>}, {pipeline_mode = #tpu.pipeline_mode<synchronous>, transform_indices = @transform_6, window_bounds = array<i64: 1, 64>}, {transform_indices = @transform_7, window_bounds = array<i64: 16, 64>}]} {
    %c0 = arith.constant 0 : index
    %c0_0 = arith.constant 0 : index
    %0 = vector.load %arg1[%c0, %c0_0] : memref<16x64xf32, #tpu.memory_space<vmem>>, vector<16x64xf32>
    %c0_1 = arith.constant 0 : index
    %c0_2 = arith.constant 0 : index
    %1 = vector.load %arg2[%c0_1, %c0_2] : memref<1x64xf32, #tpu.memory_space<vmem>>, vector<1x64xf32>
    %c0_3 = arith.constant 0 : index
    %c0_4 = arith.constant 0 : index
    %2 = vector.load %arg3[%c0_3, %c0_4] : memref<1x64xf32, #tpu.memory_space<vmem>>, vector<1x64xf32>
    %cst = arith.constant dense<0.000000e+00> : vector<16xf32>
    %3 = vector.multi_reduction <add>, %0, %cst [1] : vector<16x64xf32> to vector<16xf32>
    %4 = vector.shape_cast %3 : vector<16xf32> to vector<16x1xf32>
    %cst_5 = arith.constant 6.400000e+01 : f32
    %5 = vector.broadcast %cst_5 : f32 to vector<16x1xf32>
    %6 = arith.divf %4, %5 : vector<16x1xf32>
    %7 = vector.broadcast %6 : vector<16x1xf32> to vector<16x64xf32>
    %8 = arith.subf %0, %7 : vector<16x64xf32>
    %9 = arith.mulf %8, %8 : vector<16x64xf32>
    %cst_6 = arith.constant dense<0.000000e+00> : vector<16xf32>
    %10 = vector.multi_reduction <add>, %9, %cst_6 [1] : vector<16x64xf32> to vector<16xf32>
    %11 = vector.shape_cast %10 : vector<16xf32> to vector<16x1xf32>
    %cst_7 = arith.constant 6.400000e+01 : f32
    %12 = vector.broadcast %cst_7 : f32 to vector<16x1xf32>
    %13 = arith.divf %11, %12 : vector<16x1xf32>
    %cst_8 = arith.constant 9.99999974E-6 : f32
    %14 = vector.broadcast %cst_8 : f32 to vector<16x1xf32>
    %15 = arith.addf %13, %14 : vector<16x1xf32>
    %16 = math.rsqrt %15 : vector<16x1xf32>
    %17 = vector.broadcast %16 : vector<16x1xf32> to vector<16x64xf32>
    %18 = arith.mulf %8, %17 : vector<16x64xf32>
    %19 = vector.broadcast %1 : vector<1x64xf32> to vector<16x64xf32>
    %20 = arith.mulf %18, %19 : vector<16x64xf32>
    %21 = vector.broadcast %2 : vector<1x64xf32> to vector<16x64xf32>
    %22 = arith.addf %20, %21 : vector<16x64xf32>
    %23 = arith.truncf %22 : vector<16x64xf32> to vector<16x64xbf16>
    %c0_9 = arith.constant 0 : index
    %c0_10 = arith.constant 0 : index
    %24 = vector.load %arg4[%c0_9, %c0_10] : memref<64x128xbf16, #tpu.memory_space<vmem>>, vector<64x128xbf16>
    %cst_11 = arith.constant dense<0.000000e+00> : vector<16x128xf32>
    %25 = tpu.matmul %23, %24, %cst_11 {dimension_numbers = #tpu.dot_dimension_numbers<[1], [0], [0], [1], [0, 0, 1, 1], [], []>} : vector<16x64xbf16>, vector<64x128xbf16>, vector<16x128xf32> -> vector<16x128xf32>
    %c0_12 = arith.constant 0 : index
    %c0_13 = arith.constant 0 : index
    %26 = vector.load %arg5[%c0_12, %c0_13] : memref<1x128xf32, #tpu.memory_space<vmem>>, vector<1x128xf32>
    %27 = vector.broadcast %26 : vector<1x128xf32> to vector<16x128xf32>
    %28 = arith.addf %25, %27 : vector<16x128xf32>
    %cst_14 = arith.constant 5.000000e-01 : f32
    %29 = vector.broadcast %cst_14 : f32 to vector<16x128xf32>
    %30 = arith.mulf %29, %28 : vector<16x128xf32>
    %cst_15 = arith.constant 0.707106769 : f32
    %31 = vector.broadcast %cst_15 : f32 to vector<16x128xf32>
    %32 = arith.mulf %28, %31 : vector<16x128xf32>
    %33 = math.erf %32 : vector<16x128xf32>
    %cst_16 = arith.constant 1.000000e+00 : f32
    %34 = vector.broadcast %cst_16 : f32 to vector<16x128xf32>
    %35 = arith.addf %34, %33 : vector<16x128xf32>
    %36 = arith.mulf %30, %35 : vector<16x128xf32>
    %37 = arith.truncf %36 : vector<16x128xf32> to vector<16x128xbf16>
    %c0_17 = arith.constant 0 : index
    %c0_18 = arith.constant 0 : index
    %38 = vector.load %arg6[%c0_17, %c0_18] : memref<128x64xbf16, #tpu.memory_space<vmem>>, vector<128x64xbf16>
    %cst_19 = arith.constant dense<0.000000e+00> : vector<16x64xf32>
    %39 = tpu.matmul %37, %38, %cst_19 {dimension_numbers = #tpu.dot_dimension_numbers<[1], [0], [0], [1], [0, 0, 1, 1], [], []>} : vector<16x128xbf16>, vector<128x64xbf16>, vector<16x64xf32> -> vector<16x64xf32>
    %c0_20 = arith.constant 0 : index
    %c0_21 = arith.constant 0 : index
    %40 = vector.load %arg7[%c0_20, %c0_21] : memref<1x64xf32, #tpu.memory_space<vmem>>, vector<1x64xf32>
    %41 = vector.broadcast %40 : vector<1x64xf32> to vector<16x64xf32>
    %42 = arith.addf %39, %41 : vector<16x64xf32>
    %43 = arith.addf %42, %0 : vector<16x64xf32>
    %c0_22 = arith.constant 0 : index
    %c0_23 = arith.constant 0 : index
    %44 = vector.load %arg8[%c0_22, %c0_23] : memref<16x64xf32, #tpu.memory_space<vmem>>, vector<16x64xf32>
    tpu.vector_store %arg8[%c0_22, %c0_23], %43 {strides = array<i32>} : memref<16x64xf32, #tpu.memory_space<vmem>>, vector<16x64xf32>,
    return
  }
  func.func @transform_0(%arg0: i32) -> (i32, i32) {
    %c0_i32 = arith.constant 0 : i32
    %c0_i32_0 = arith.constant 0 : i32
    return %arg0, %c0_i32 : i32, i32
  }
  func.func @transform_1(%arg0: i32) -> (i32, i32) {
    %c0_i32 = arith.constant 0 : i32
    %c0_i32_0 = arith.constant 0 : i32
    %c0_i32_1 = arith.constant 0 : i32
    return %c0_i32, %c0_i32_0 : i32, i32
  }
  func.func @transform_2(%arg0: i32) -> (i32, i32) {
    %c0_i32 = arith.constant 0 : i32
    %c0_i32_0 = arith.constant 0 : i32
    %c0_i32_1 = arith.constant 0 : i32
    return %c0_i32, %c0_i32_0 : i32, i32
  }
  func.func @transform_3(%arg0: i32) -> (i32, i32) {
    %c0_i32 = arith.constant 0 : i32
    %c0_i32_0 = arith.constant 0 : i32
    %c0_i32_1 = arith.constant 0 : i32
    return %c0_i32, %c0_i32_0 : i32, i32
  }
  func.func @transform_4(%arg0: i32) -> (i32, i32) {
    %c0_i32 = arith.constant 0 : i32
    %c0_i32_0 = arith.constant 0 : i32
    %c0_i32_1 = arith.constant 0 : i32
    return %c0_i32, %c0_i32_0 : i32, i32
  }
  func.func @transform_5(%arg0: i32) -> (i32, i32) {
    %c0_i32 = arith.constant 0 : i32
    %c0_i32_0 = arith.constant 0 : i32
    %c0_i32_1 = arith.constant 0 : i32
    return %c0_i32, %c0_i32_0 : i32, i32
  }
  func.func @transform_6(%arg0: i32) -> (i32, i32) {
    %c0_i32 = arith.constant 0 : i32
    %c0_i32_0 = arith.constant 0 : i32
    %c0_i32_1 = arith.constant 0 : i32
    return %c0_i32, %c0_i32_0 : i32, i32
  }
  func.func @transform_7(%arg0: i32) -> (i32, i32) {
    %c0_i32 = arith.constant 0 : i32
    %c0_i32_0 = arith.constant 0 : i32
    return %arg0, %c0_i32 : i32, i32
  }
}

module attributes {stable_mosaic.version = 11 : i64} {
  func.func @_mlp_kernel(%arg0: i32, %arg1: memref<16x64xf32, #tpu.memory_space<vmem>>, %arg2: memref<64x128xbf16, #tpu.memory_space<vmem>>, %arg3: memref<1x128xf32, #tpu.memory_space<vmem>>, %arg4: memref<128x128xbf16, #tpu.memory_space<vmem>>, %arg5: memref<1x128xf32, #tpu.memory_space<vmem>>, %arg6: memref<16x128xf32, #tpu.memory_space<vmem>>) attributes {dimension_semantics = [#tpu.dimension_semantics<parallel>], iteration_bounds = array<i64: 1>, scalar_prefetch = 0 : i64, scratch_operands = 0 : i64, tpu.core_type = #tpu.core_type<tc>, window_params = [{transform_indices = @transform_0, window_bounds = array<i64: 16, 64>}, {pipeline_mode = #tpu.pipeline_mode<synchronous>, transform_indices = @transform_1, window_bounds = array<i64: 64, 128>}, {pipeline_mode = #tpu.pipeline_mode<synchronous>, transform_indices = @transform_2, window_bounds = array<i64: 1, 128>}, {pipeline_mode = #tpu.pipeline_mode<synchronous>, transform_indices = @transform_3, window_bounds = array<i64: 128, 128>}, {pipeline_mode = #tpu.pipeline_mode<synchronous>, transform_indices = @transform_4, window_bounds = array<i64: 1, 128>}, {transform_indices = @transform_5, window_bounds = array<i64: 16, 128>}]} {
    %c0 = arith.constant 0 : index
    %c0_0 = arith.constant 0 : index
    %0 = vector.load %arg1[%c0, %c0_0] : memref<16x64xf32, #tpu.memory_space<vmem>>, vector<16x64xf32>
    %1 = arith.truncf %0 : vector<16x64xf32> to vector<16x64xbf16>
    %c0_1 = arith.constant 0 : index
    %c0_2 = arith.constant 0 : index
    %2 = vector.load %arg2[%c0_1, %c0_2] : memref<64x128xbf16, #tpu.memory_space<vmem>>, vector<64x128xbf16>
    %cst = arith.constant dense<0.000000e+00> : vector<16x128xf32>
    %3 = tpu.matmul %1, %2, %cst {dimension_numbers = #tpu.dot_dimension_numbers<[1], [0], [0], [1], [0, 0, 1, 1], [], []>} : vector<16x64xbf16>, vector<64x128xbf16>, vector<16x128xf32> -> vector<16x128xf32>
    %c0_3 = arith.constant 0 : index
    %c0_4 = arith.constant 0 : index
    %4 = vector.load %arg3[%c0_3, %c0_4] : memref<1x128xf32, #tpu.memory_space<vmem>>, vector<1x128xf32>
    %5 = vector.broadcast %4 : vector<1x128xf32> to vector<16x128xf32>
    %6 = arith.addf %3, %5 : vector<16x128xf32>
    %cst_5 = arith.constant 5.000000e-01 : f32
    %7 = vector.broadcast %cst_5 : f32 to vector<16x128xf32>
    %8 = arith.mulf %7, %6 : vector<16x128xf32>
    %cst_6 = arith.constant 0.707106769 : f32
    %9 = vector.broadcast %cst_6 : f32 to vector<16x128xf32>
    %10 = arith.mulf %6, %9 : vector<16x128xf32>
    %11 = math.erf %10 : vector<16x128xf32>
    %cst_7 = arith.constant 1.000000e+00 : f32
    %12 = vector.broadcast %cst_7 : f32 to vector<16x128xf32>
    %13 = arith.addf %12, %11 : vector<16x128xf32>
    %14 = arith.mulf %8, %13 : vector<16x128xf32>
    %15 = arith.truncf %14 : vector<16x128xf32> to vector<16x128xbf16>
    %c0_8 = arith.constant 0 : index
    %c0_9 = arith.constant 0 : index
    %16 = vector.load %arg4[%c0_8, %c0_9] : memref<128x128xbf16, #tpu.memory_space<vmem>>, vector<128x128xbf16>
    %cst_10 = arith.constant dense<0.000000e+00> : vector<16x128xf32>
    %17 = tpu.matmul %15, %16, %cst_10 {dimension_numbers = #tpu.dot_dimension_numbers<[1], [0], [0], [1], [0, 0, 1, 1], [], []>} : vector<16x128xbf16>, vector<128x128xbf16>, vector<16x128xf32> -> vector<16x128xf32>
    %c0_11 = arith.constant 0 : index
    %c0_12 = arith.constant 0 : index
    %18 = vector.load %arg5[%c0_11, %c0_12] : memref<1x128xf32, #tpu.memory_space<vmem>>, vector<1x128xf32>
    %19 = vector.broadcast %18 : vector<1x128xf32> to vector<16x128xf32>
    %20 = arith.addf %17, %19 : vector<16x128xf32>
    %c0_13 = arith.constant 0 : index
    %c0_14 = arith.constant 0 : index
    %21 = vector.load %arg6[%c0_13, %c0_14] : memref<16x128xf32, #tpu.memory_space<vmem>>, vector<16x128xf32>
    tpu.vector_store %arg6[%c0_13, %c0_14], %20 {strides = array<i32>} : memref<16x128xf32, #tpu.memory_space<vmem>>, vector<16x128xf32>,
    return
  }
  func.func @transform_0(%arg0: i32) -> (i32, i32) {
    %c0_i32 = arith.constant 0 : i32
    %c0_i32_0 = arith.constant 0 : i32
    return %arg0, %c0_i32 : i32, i32
  }
  func.func @transform_1(%arg0: i32) -> (i32, i32) {
    %c0_i32 = arith.constant 0 : i32
    %c0_i32_0 = arith.constant 0 : i32
    %c0_i32_1 = arith.constant 0 : i32
    return %c0_i32, %c0_i32_0 : i32, i32
  }
  func.func @transform_2(%arg0: i32) -> (i32, i32) {
    %c0_i32 = arith.constant 0 : i32
    %c0_i32_0 = arith.constant 0 : i32
    %c0_i32_1 = arith.constant 0 : i32
    return %c0_i32, %c0_i32_0 : i32, i32
  }
  func.func @transform_3(%arg0: i32) -> (i32, i32) {
    %c0_i32 = arith.constant 0 : i32
    %c0_i32_0 = arith.constant 0 : i32
    %c0_i32_1 = arith.constant 0 : i32
    return %c0_i32, %c0_i32_0 : i32, i32
  }
  func.func @transform_4(%arg0: i32) -> (i32, i32) {
    %c0_i32 = arith.constant 0 : i32
    %c0_i32_0 = arith.constant 0 : i32
    %c0_i32_1 = arith.constant 0 : i32
    return %c0_i32, %c0_i32_0 : i32, i32
  }
  func.func @transform_5(%arg0: i32) -> (i32, i32) {
    %c0_i32 = arith.constant 0 : i32
    %c0_i32_0 = arith.constant 0 : i32
    return %arg0, %c0_i32 : i32, i32
  }
}

</mosaic_0001>

<llo_original>
// kernel: numformer_forward.9
$region0: #{numformer_forward.9}
  #allocation0 [shape = 'u32[]', space=smem, size = 0x4, offset = 0x4, fixed_abs, tag = 'smem constant byte address 0x4 - core index']
  #allocation1 [shape = 'u32[144,128]{1,0:T(1,128)}', space=vmem, size = 0x12000, scoped, tag = 'internal scratch']
  %s0 = inlined_call_operand.vmem [shape: f32[2,8,64], index: 0, kind: input, shape index: {}]
  %s1 = inlined_call_operand.vmem [shape: f32[2,8,1], index: 1, kind: input, shape index: {}]
  %s2 = inlined_call_operand.vmem [shape: f32[8,64], index: 2, kind: input, shape index: {}]
  %s3 = inlined_call_operand.vmem [shape: f32[2,8,64], index: 3, kind: output, shape index: {}]
  %s4 = sld [smem:[#allocation0]]
  $region45: #{numformer_forward.9} parent=0
    _
  %s6 = ssub.s32 1, %s4
  %s7 = scalar_select 0, %s6, %s4
  loop: start=0, step=1, limit=4
  $region2: #{numformer_forward.9} parent=0 // loop_pre_header
    _
  $region3: #{numformer_forward.9} parent=0 // loop_header
    %s9 = sphi 0, %s13
    %p10 = scmp.ge.s32.totalorder %s9, 4
    %s16 = sphi 0, %s28
    %s17 = sphi 0, %s24
    %s18 = sphi 0, %s16
    %s19 = sphi 0, %s17
    %s20 = sphi 0, %s18
    %s21 = sphi 0, %s19
    %s33 = sphi 0, %s35
    %s36 = sphi 0, %s33
    %s37 = sphi 0, %s36
    %s53 = sphi 0, %s37
    %s61 = sphi 0, %s63
    %s64 = sphi 0, %s61
    %s65 = sphi 0, %s64
    %s81 = sphi 0, %s65
    %s87 = sphi 0, %s89
    %s90 = sphi 0, %s87
    %s91 = sphi 0, %s90
    %s107 = sphi 0, %s91
    %s115 = sphi 0, %s117
    %s118 = sphi 0, %s115
    %s119 = sphi 0, %s118
    %s135 = sphi 0, %s119
  $region4: #{numformer_forward.9} parent=0 // loop_header_branch
    %12 = sbr.rel (%p10) target = $region8
  $region5: #{numformer_forward.9} parent=0 // loop_body
    %s14 = ssub.s32 %s9, 1
    %s15 = ssub.s32 %s9, 2
    %s22 = sadd.s32 1, %s17
    %p23 = scmp.ge.s32.totalorder %s22, 1
    %s24 = scalar_select %p23, 0, %s22
    %s25 = sadd.s32 1, %s16
    %s26 = scalar_select %p23, %s25, %s16
    %p27 = scmp.ge.s32.totalorder %s26, 2
    %s28 = scalar_select %p27, 0, %s26
    %s29 = ssub.s32 %s16, %s28
    %s30 = ssub.s32 %s17, %s24
    %s31 = sor.u32 %s29, %s30
    %p32 = scmp.eq.s32.totalorder %s31, 0
    %s34 = sadd.s32 %s33, 1
    %s35 = scalar_select %p32, %s33, %s34
    %p38 = pneg %p32
    %p39 = scmp.eq.s32.totalorder %s9, 1
    %p40 = por %p38, %p39
    %p41 = scmp.ne.s32.totalorder %s33, %s36
    %p42 = scmp.eq.s32.totalorder %s9, 0
    %p43 = por %p41, %p42
    %p44 = scmp.ne.s32.totalorder %s33, %s36
    %p45 = scmp.eq.s32.totalorder %s14, 1
    %p46 = por %p44, %p45
    %p47 = scmp.ne.s32.totalorder %s36, %s37
    %p48 = scmp.eq.s32.totalorder %s14, 0
    %p49 = por %p47, %p48
    %p50 = scmp.ne.s32.totalorder %s36, %s37
    %p51 = scmp.eq.s32.totalorder %s15, 1
    %p52 = por %p50, %p51
    %p54 = scmp.ne.s32.totalorder %s37, %s53
    %p55 = scmp.eq.s32.totalorder %s15, 0
    %p56 = por %p54, %p55
    %s57 = ssub.s32 %s16, %s28
    %s58 = ssub.s32 %s17, %s24
    %s59 = sor.u32 %s57, %s58
    %p60 = scmp.eq.s32.totalorder %s59, 0
    %s62 = sadd.s32 %s61, 1
    %s63 = scalar_select %p60, %s61, %s62
    %p66 = pneg %p60
    %p67 = scmp.eq.s32.totalorder %s9, 1
    %p68 = por %p66, %p67
    %p69 = scmp.ne.s32.totalorder %s61, %s64
    %p70 = scmp.eq.s32.totalorder %s9, 0
    %p71 = por %p69, %p70
    %p72 = scmp.ne.s32.totalorder %s61, %s64
    %p73 = scmp.eq.s32.totalorder %s14, 1
    %p74 = por %p72, %p73
    %p75 = scmp.ne.s32.totalorder %s64, %s65
    %p76 = scmp.eq.s32.totalorder %s14, 0
    %p77 = por %p75, %p76
    %p78 = scmp.ne.s32.totalorder %s64, %s65
    %p79 = scmp.eq.s32.totalorder %s15, 1
    %p80 = por %p78, %p79
    %p82 = scmp.ne.s32.totalorder %s65, %s81
    %p83 = scmp.eq.s32.totalorder %s15, 0
    %p84 = por %p82, %p83
    %s85 = ssub.s32 %s17, %s24
    %p86 = scmp.eq.s32.totalorder %s85, 0
    %s88 = sadd.s32 %s87, 1
    %s89 = scalar_select %p86, %s87, %s88
    %p92 = pneg %p86
    %p93 = scmp.eq.s32.totalorder %s9, 1
    %p94 = por %p92, %p93
    %p95 = scmp.ne.s32.totalorder %s87, %s90
    %p96 = scmp.eq.s32.totalorder %s9, 0
    %p97 = por %p95, %p96
    %p98 = scmp.ne.s32.totalorder %s87, %s90
    %p99 = scmp.eq.s32.totalorder %s14, 1
    %p100 = por %p98, %p99
    %p101 = scmp.ne.s32.totalorder %s90, %s91
    %p102 = scmp.eq.s32.totalorder %s14, 0
    %p103 = por %p101, %p102
    %p104 = scmp.ne.s32.totalorder %s90, %s91
    %p105 = scmp.eq.s32.totalorder %s15, 1
    %p106 = por %p104, %p105
    %p108 = scmp.ne.s32.totalorder %s91, %s107
    %p109 = scmp.eq.s32.totalorder %s15, 0
    %p110 = por %p108, %p109
    %s111 = ssub.s32 %s16, %s28
    %s112 = ssub.s32 %s17, %s24
    %s113 = sor.u32 %s111, %s112
    %p114 = scmp.eq.s32.totalorder %s113, 0
    %s116 = sadd.s32 %s115, 1
    %s117 = scalar_select %p114, %s115, %s116
    %p120 = pneg %p114
    %p121 = scmp.eq.s32.totalorder %s9, 1
    %p122 = por %p120, %p121
    %p123 = scmp.ne.s32.totalorder %s115, %s118
    %p124 = scmp.eq.s32.totalorder %s9, 0
    %p125 = por %p123, %p124
    %p126 = scmp.ne.s32.totalorder %s115, %s118
    %p127 = scmp.eq.s32.totalorder %s14, 1
    %p128 = por %p126, %p127
    %p129 = scmp.ne.s32.totalorder %s118, %s119
    %p130 = scmp.eq.s32.totalorder %s14, 0
    %p131 = por %p129, %p130
    %p132 = scmp.ne.s32.totalorder %s118, %s119
    %p133 = scmp.eq.s32.totalorder %s15, 1
    %p134 = por %p132, %p133
    %p136 = scmp.ne.s32.totalorder %s119, %s135
    %p137 = scmp.eq.s32.totalorder %s15, 0
    %p138 = por %p136, %p137
    %p139 = scmp.le.s32.totalorder 1, %s9
    %p140 = scmp.lt.s32.totalorder %s9, 3
    %p141 = pnand %p139, %p140
    %p142 = pneg %p141
    // Predicated region
    $region9: #{numformer_forward.9} parent=5 // pred_check
      _
    $region10: #{numformer_forward.9} parent=5 // pred_check_branch
      %144 = sbr.rel (%p141) target = $region12
    $region11: #{numformer_forward.9} parent=5 // pred_region
      %s145 = ssub.s32 %s9, 1
      // Predicated region
      $region13: #{numformer_forward.9} parent=11 // pred_check
        %p146 = pneg %p103
      $region14: #{numformer_forward.9} parent=11 // pred_check_branch
        %148 = sbr.rel (%p146) target = $region16
      $region15: #{numformer_forward.9} parent=11 // pred_region
        %p149 = scmp.lt.s32.totalorder %s19, 0
        %s150 = scalar_select %p149, %s19, 0
        %s151 = smul.addr %s150, 8
        %s152 = scalar_lea.vmem %s2, %s151
      $region16: #{numformer_forward.9} parent=11 // pred_fallthru
        _
    $region12: #{numformer_forward.9} parent=5 // pred_fallthru
      _
    %p153 = scmp.lt.s32.totalorder %s9, 2
    // Predicated region
    $region17: #{numformer_forward.9} parent=5 // pred_check
      %p154 = pneg %p153
    $region18: #{numformer_forward.9} parent=5 // pred_check_branch
      %156 = sbr.rel (%p154) target = $region20
    $region19: #{numformer_forward.9} parent=5 // pred_region
      // Predicated region
      $region21: #{numformer_forward.9} parent=19 // pred_check
        %p157 = pneg %p43
      $region22: #{numformer_forward.9} parent=19 // pred_check_branch
        %159 = sbr.rel (%p157) target = $region24
      $region23: #{numformer_forward.9} parent=19 // pred_region
        %p160 = scmp.lt.s32.totalorder %s16, 1
        %s161 = scalar_select %p160, %s16, 1
        %p162 = scmp.lt.s32.totalorder %s17, 0
        %s163 = scalar_select %p162, %s17, 0
        %s164 = sadd.s32 %s163, %s161
        %s165 = smul.addr %s164, 8
        %s166 = scalar_lea.vmem %s0, %s165
      $region24: #{numformer_forward.9} parent=19 // pred_fallthru
        _
      // Predicated region
      $region25: #{numformer_forward.9} parent=19 // pred_check
        %p167 = pneg %p71
      $region26: #{numformer_forward.9} parent=19 // pred_check_branch
        %169 = sbr.rel (%p167) target = $region28
      $region27: #{numformer_forward.9} parent=19 // pred_region
        %p170 = scmp.lt.s32.totalorder %s16, 1
        %s171 = scalar_select %p170, %s16, 1
        %p172 = scmp.lt.s32.totalorder %s17, 0
        %s173 = scalar_select %p172, %s17, 0
        %s174 = sadd.s32 %s173, %s171
        %s175 = smul.addr %s174, 8
        %s176 = scalar_lea.vmem %s1, %s175
      $region28: #{numformer_forward.9} parent=19 // pred_fallthru
        _
    $region20: #{numformer_forward.9} parent=5 // pred_fallthru
      _
    %p177 = scmp.le.s32.totalorder 1, %s9
    %p178 = scmp.lt.s32.totalorder %s9, 3
    %p179 = pnand %p177, %p178
    %p180 = pneg %p179
    // Predicated region
    $region29: #{numformer_forward.9} parent=5 // pred_check
      _
    $region30: #{numformer_forward.9} parent=5 // pred_check_branch
      %182 = sbr.rel (%p179) target = $region32
    $region31: #{numformer_forward.9} parent=5 // pred_region
      %s183 = ssub.s32 %s9, 1
      %p184 = scmp.lt.s32.totalorder %s18, 1
      %s185 = scalar_select %p184, %s18, 1
      %p186 = scmp.lt.s32.totalorder %s19, 0
      %s187 = scalar_select %p186, %s19, 0
      %s188 = sadd.s32 %s187, %s185
      %s189 = smul.addr %s188, 8
      %s190 = scalar_lea.vmem %s0, %s189
      %p191 = pneg %p49
      %p192 = pneg %p46
      %p193 = scmp.lt.s32.totalorder %s18, 1
      %s194 = scalar_select %p193, %s18, 1
      %p195 = scmp.lt.s32.totalorder %s19, 0
      %s196 = scalar_select %p195, %s19, 0
      %s197 = sadd.s32 %s196, %s194
      %s198 = smul.addr %s197, 8
      %s199 = scalar_lea.vmem %s1, %s198
      %p200 = pneg %p77
      %p201 = pneg %p74
      %p202 = scmp.lt.s32.totalorder %s19, 0
      %s203 = scalar_select %p202, %s19, 0
      %s204 = smul.addr %s203, 8
      %s205 = scalar_lea.vmem %s2, %s204
      %p206 = pneg %p103
      %p207 = pneg %p100
      %p208 = pneg %p131
      %p209 = pneg %p128
      %p210 = scmp.lt.s32.totalorder %s18, 1
      %s211 = scalar_select %p210, %s18, 1
      %p212 = scmp.lt.s32.totalorder %s19, 0
      %s213 = scalar_select %p212, %s19, 0
      %s214 = sadd.s32 %s213, %s211
      %s215 = smul.addr %s214, 8
      %s216 = scalar_lea.vmem %s3, %s215
      %p217 = scmp.lt.s32.totalorder %s18, 1
      %s218 = scalar_select %p217, %s18, 1
      %p219 = scmp.lt.s32.totalorder %s19, 0
      %s220 = scalar_select %p219, %s19, 0
      %s221 = sadd.s32 %s220, %s218
      %s222 = smul.addr %s221, 8
      %s223 = scalar_lea.vmem %s0, %s222
      %p224 = scmp.lt.s32.totalorder %s18, 1
      %s225 = scalar_select %p224, %s18, 1
      %p226 = scmp.lt.s32.totalorder %s19, 0
      %s227 = scalar_select %p226, %s19, 0
      %s228 = sadd.s32 %s227, %s225
      %s229 = smul.addr %s228, 8
      %s230 = scalar_lea.vmem %s1, %s229
      %p231 = scmp.lt.s32.totalorder %s19, 0
      %s232 = scalar_select %p231, %s19, 0
      %s233 = smul.addr %s232, 8
      %s234 = scalar_lea.vmem %s2, %s233
      %p235 = scmp.lt.s32.totalorder %s18, 1
      %s236 = scalar_select %p235, %s18, 1
      %p237 = scmp.lt.s32.totalorder %s19, 0
      %s238 = scalar_select %p237, %s19, 0
      %s239 = sadd.s32 %s238, %s236
      %s240 = smul.addr %s239, 8
      %s241 = scalar_lea.vmem %s3, %s240
      %v242 = vld [vmem:[%s223] sm:$0xff]
      %v243 = vld [vmem:[%s230] sm:$0xff]
      %245 = vset.pattern.permute.xlu0 0
      %246 = vperm.xlu0 %245, %v243
      %v247 = vpop.permute.xlu0 %246
      %v249 = vmul.f32 %v242, %v247
      %v250 = vld [vmem:[%s234] sm:$0xff]
      %v251 = vadd.f32 %v249, %v250
      %vm252 = vcmask 523264
      %253 = vst.msk [vmem:[%s241] sm:$0xff] %vm252, %v251
      %p254 = scmp.lt.s32.totalorder %s18, 1
      %s255 = scalar_select %p254, %s18, 1
      %p256 = scmp.lt.s32.totalorder %s19, 0
      %s257 = scalar_select %p256, %s19, 0
      %s258 = sadd.s32 %s257, %s255
      %s259 = smul.addr %s258, 8
      %s260 = scalar_lea.vmem %s3, %s259
      // Predicated region
      $region33: #{numformer_forward.9} parent=31 // pred_check
        %p261 = pneg %p128
      $region34: #{numformer_forward.9} parent=31 // pred_check_branch
        %263 = sbr.rel (%p261) target = $region36
      $region35: #{numformer_forward.9} parent=31 // pred_region
        _
      $region36: #{numformer_forward.9} parent=31 // pred_fallthru
        _
    $region32: #{numformer_forward.9} parent=5 // pred_fallthru
      _
    %p264 = scmp.le.s32.totalorder 2, %s9
    // Predicated region
    $region37: #{numformer_forward.9} parent=5 // pred_check
      %p265 = pneg %p264
    $region38: #{numformer_forward.9} parent=5 // pred_check_branch
      %267 = sbr.rel (%p265) target = $region40
    $region39: #{numformer_forward.9} parent=5 // pred_region
      %s268 = ssub.s32 %s9, 2
      // Predicated region
      $region41: #{numformer_forward.9} parent=39 // pred_check
        %p269 = pneg %p134
      $region42: #{numformer_forward.9} parent=39 // pred_check_branch
        %271 = sbr.rel (%p269) target = $region44
      $region43: #{numformer_forward.9} parent=39 // pred_region
        %p272 = scmp.lt.s32.totalorder %s20, 1
        %s273 = scalar_select %p272, %s20, 1
        %p274 = scmp.lt.s32.totalorder %s21, 0
        %s275 = scalar_select %p274, %s21, 0
        %s276 = sadd.s32 %s275, %s273
        %s277 = smul.addr %s276, 8
        %s278 = scalar_lea.vmem %s3, %s277
      $region44: #{numformer_forward.9} parent=39 // pred_fallthru
        _
    $region40: #{numformer_forward.9} parent=5 // pred_fallthru
      _
  $region6: #{numformer_forward.9} parent=0 // loop_footer
    %s13 = sadd.s32 1, %s9
  $region7: #{numformer_forward.9} parent=0 // loop_footer_branch
    %8 = sbr.rel target = $region3
  $region8: #{numformer_forward.9} parent=0 // loop_exit
    _

// kernel: numformer_forward.10
$region0: #{numformer_forward.10}
  #allocation0 [shape = 'u32[]', space=smem, size = 0x4, offset = 0x4, fixed_abs, tag = 'smem constant byte address 0x4 - core index']
  #allocation1 [shape = 'u32[144,128]{1,0:T(1,128)}', space=vmem, size = 0x12000, scoped, tag = 'internal scratch']
  %s0 = inlined_call_operand.vmem [shape: f32[16,64], index: 0, kind: input, shape index: {}]
  %s1 = inlined_call_operand.vmem [shape: f32[1,64], index: 1, kind: input, shape index: {}]
  %s2 = inlined_call_operand.vmem [shape: f32[1,64], index: 2, kind: input, shape index: {}]
  %s3 = inlined_call_operand.vmem [shape: bf16[64,192], index: 3, kind: input, shape index: {}]
  %s4 = inlined_call_operand.vmem [shape: f32[1,192], index: 4, kind: input, shape index: {}]
  %s5 = inlined_call_operand.vmem [shape: f32[16,192], index: 5, kind: output, shape index: {}]
  %s6 = sld [smem:[#allocation0]]
  $region30: #{numformer_forward.10} parent=0
    _
  %s8 = ssub.s32 1, %s6
  %s9 = scalar_select 0, %s8, %s6
  // Predicated region
  $region2: #{numformer_forward.10} parent=0 // pred_check
    _
  $region3: #{numformer_forward.10} parent=0 // pred_check_branch
    %11 = sbr.rel (0) target = $region5
  $region4: #{numformer_forward.10} parent=0 // pred_region
    _
  $region5: #{numformer_forward.10} parent=0 // pred_fallthru
    _
  // Predicated region
  $region6: #{numformer_forward.10} parent=0 // pred_check
    _
  $region7: #{numformer_forward.10} parent=0 // pred_check_branch
    %13 = sbr.rel (0) target = $region9
  $region8: #{numformer_forward.10} parent=0 // pred_region
    _
  $region9: #{numformer_forward.10} parent=0 // pred_fallthru
    _
  // Predicated region
  $region10: #{numformer_forward.10} parent=0 // pred_check
    _
  $region11: #{numformer_forward.10} parent=0 // pred_check_branch
    %15 = sbr.rel (0) target = $region13
  $region12: #{numformer_forward.10} parent=0 // pred_region
    _
  $region13: #{numformer_forward.10} parent=0 // pred_fallthru
    _
  // Predicated region
  $region14: #{numformer_forward.10} parent=0 // pred_check
    _
  $region15: #{numformer_forward.10} parent=0 // pred_check_branch
    %17 = sbr.rel (0) target = $region17
  $region16: #{numformer_forward.10} parent=0 // pred_region
    _
  $region17: #{numformer_forward.10} parent=0 // pred_fallthru
    _
  // Predicated region
  $region18: #{numformer_forward.10} parent=0 // pred_check
    _
  $region19: #{numformer_forward.10} parent=0 // pred_check_branch
    %19 = sbr.rel (0) target = $region21
  $region20: #{numformer_forward.10} parent=0 // pred_region
    _
  $region21: #{numformer_forward.10} parent=0 // pred_fallthru
    _
  %v21 = vld [vmem:[%s0] sm:$0xff]
  %v22 = vld [vmem:[%s0 + $0x8] sm:$0xff]
  %v23 = vld [vmem:[%s1] sm:$0x1]
  %v24 = vld [vmem:[%s2] sm:$0x1]
  %vm25 = vcmask 523264
  %v26 = vsel %vm25, %v21, 0.0
  %27 = vadd.xlane.f32.xlu0 %v26
  %v28 = vpop.xlane.xlu0 %27
  %v29 = vsel %vm25, %v22, 0.0
  %30 = vadd.xlane.f32.xlu0 %v29
  %v31 = vpop.xlane.xlu0 %30
  %v32 = vrcp.pop 64.0
  %v33 = vmul.f32 %v28, %v32
  %v34 = vmul.f32 %v31, %v32
  %v35 = vsub.f32 %v21, %v33
  %v36 = vsub.f32 %v22, %v34
  %v37 = vmul.f32 %v35, %v35
  %v38 = vmul.f32 %v36, %v36
  %v39 = vsel %vm25, %v37, 0.0
  %40 = vadd.xlane.f32.xlu0 %v39
  %v41 = vpop.xlane.xlu0 %40
  %v42 = vsel %vm25, %v38, 0.0
  %43 = vadd.xlane.f32.xlu0 %v42
  %v44 = vpop.xlane.xlu0 %43
  %v45 = vmul.f32 %v41, %v32
  %v46 = vmul.f32 %v44, %v32
  %v47 = vadd.f32 %v45, 1e-05
  %v48 = vadd.f32 %v46, 1e-05
  %v49 = vrsqrt.pop %v47
  %v50 = vrsqrt.pop %v48
  %v51 = vmul.f32 %v35, %v49
  %v52 = vmul.f32 %v36, %v50
  %v54 = vlaneseq
  %v55 = vshrl.u32 %v54, 7
  %v56 = vsub.s32 0, %v55
  %v57 = vrot.slane %v23, %v56
  %v59 = vmul.f32 %v51, %v57
  %v60 = vmul.f32 %v52, %v57
  %v62 = vlaneseq
  %v63 = vshrl.u32 %v62, 7
  %v64 = vsub.s32 0, %v63
  %v65 = vrot.slane %v24, %v64
  %v67 = vadd.f32 %v59, %v65
  %v68 = vadd.f32 %v60, %v65
  %v69 = vpack.c.bf16 %v68, %v67
  %v70 = vld [vmem:[%s3] sm:$0xff]
  %v71 = vld [vmem:[%s3 + $0x8] sm:$0xff]
  %v72 = vld [vmem:[%s3 + $0x10] sm:$0xff]
  %v73 = vld [vmem:[%s3 + $0x18] sm:$0xff]
  %v74 = vld [vmem:[%s3 + $0x20] sm:$0xff]
  %v75 = vld [vmem:[%s3 + $0x28] sm:$0xff]
  %v76 = vld [vmem:[%s3 + $0x30] sm:$0xff]
  %v77 = vld [vmem:[%s3 + $0x38] sm:$0xff]
  %v78 = vld [vmem:[%s4] sm:$0x3]
  %v80 = vlaneseq
  %v81 = vshrl.u32 %v80, 7
  %v82 = vsub.s32 0, %v81
  %v83 = vrot.slane %v78, %v82
  %v84 = vlaneseq
  %v85 = vshrl.u32 %v84, 7
  %v86 = vsub.s32 1, %v85
  %v87 = vrot.slane %v78, %v86
  %v98 = vunpack.c.l.b16 %v70
  %v99 = vunpack.c.h.b16 %v70
  %v100 = vunpack.c.l.b16 %v71
  %v101 = vunpack.c.h.b16 %v71
  %v102 = vunpack.c.l.b16 %v72
  %v103 = vunpack.c.h.b16 %v72
  %v104 = vunpack.c.l.b16 %v73
  %v105 = vunpack.c.h.b16 %v73
  %v106 = vunpack.c.l.b16 %v74
  %v107 = vunpack.c.h.b16 %v74
  %v108 = vunpack.c.l.b16 %v75
  %v109 = vunpack.c.h.b16 %v75
  %v110 = vunpack.c.l.b16 %v76
  %v111 = vunpack.c.h.b16 %v76
  %v112 = vunpack.c.l.b16 %v77
  %v113 = vunpack.c.h.b16 %v77
  %v114 = vpack.c.b16 %v100, %v98
  %v115 = vpack.c.b16 %v101, %v99
  %v116 = vpack.c.b16 %v104, %v102
  %v117 = vpack.c.b16 %v105, %v103
  %v118 = vpack.c.b16 %v108, %v106
  %v119 = vpack.c.b16 %v109, %v107
  %v120 = vpack.c.b16 %v112, %v110
  %v121 = vpack.c.b16 %v113, %v111
  %v131 = vsel %vm25, %v69, 0
  %133 = vmatprep.subr.bf16.mxu0 %v115
  %134 = vmatpush1.bf16.msra.mxu0 %v114
  %135 = vmatprep.subr.bf16.mxu0 %v117
  %136 = vmatpush1.bf16.msra.mxu0 %v116
  %137 = vmatprep.subr.bf16.mxu0 %v119
  %138 = vmatpush1.bf16.msra.mxu0 %v118
  %139 = vmatprep.subr.bf16.mxu0 %v121
  %140 = vmatpush1.bf16.msra.mxu0 %v120
  %141 = vmatprep.subr.bf16.mxu0 0
  %142 = vmatpush1.bf16.msra.mxu0 0
  %143 = vmatprep.subr.bf16.mxu0 0
  %144 = vmatpush1.bf16.msra.mxu0 0
  %145 = vmatprep.subr.bf16.mxu0 0
  %146 = vmatpush1.bf16.msra.mxu0 0
  %147 = vmatprep.subr.bf16.mxu0 0
  %148 = vmatpush1.bf16.msra.mxu0 0
  %149 = vmatprep.subr.bf16.mxu0 0
  %150 = vmatpush1.bf16.msra.mxu0 0
  %151 = vmatprep.subr.bf16.mxu0 0
  %152 = vmatpush1.bf16.msra.mxu0 0
  %153 = vmatprep.subr.bf16.mxu0 0
  %154 = vmatpush1.bf16.msra.mxu0 0
  %155 = vmatprep.subr.bf16.mxu0 0
  %156 = vmatpush1.bf16.msra.mxu0 0
  %157 = vmatprep.subr.bf16.mxu0 0
  %158 = vmatpush1.bf16.msra.mxu0 0
  %159 = vmatprep.subr.bf16.mxu0 0
  %160 = vmatpush1.bf16.msra.mxu0 0
  %161 = vmatprep.subr.bf16.mxu0 0
  %162 = vmatpush1.bf16.msra.mxu0 0
  %163 = vmatprep.subr.bf16.mxu0 0
  %164 = vmatpush1.bf16.msra.mxu0 0
  %165 = vmatprep.mubr.bf16.mxu0 0
  %166 = vmatmul.mubr.bf16.gmra.mrb[0].mxu0 %v131
  %v167 = vpop.f32.mrb[0].mxu0
  %v168 = vadd.f32 %v83, %v167
  %v169 = vpop.f32.mrb[0].mxu0
  %v170 = vadd.f32 %v87, %v169
  %v171 = vpop.f32.mrb[0].mxu0
  %v172 = vadd.f32 %v83, %v171
  %v173 = vpop.f32.mrb[0].mxu0
  %v174 = vadd.f32 %v87, %v173
  %175 = vdwg.mxu0
  %176 = vst [vmem:[%s5] sm:$0xff] %v168
  %177 = vst.msk [vmem:[%s5 + $0x8] sm:$0xff] %vm25, %v170
  %178 = vst [vmem:[%s5 + $0x10] sm:$0xff] %v172
  %179 = vst.msk [vmem:[%s5 + $0x18] sm:$0xff] %vm25, %v174
  // Predicated region
  $region22: #{numformer_forward.10} parent=0 // pred_check
    _
  $region23: #{numformer_forward.10} parent=0 // pred_check_branch
    %181 = sbr.rel (0) target = $region25
  $region24: #{numformer_forward.10} parent=0 // pred_region
    _
  $region25: #{numformer_forward.10} parent=0 // pred_fallthru
    _
  // Predicated region
  $region26: #{numformer_forward.10} parent=0 // pred_check
    _
  $region27: #{numformer_forward.10} parent=0 // pred_check_branch
    %183 = sbr.rel (0) target = $region29
  $region28: #{numformer_forward.10} parent=0 // pred_region
    _
  $region29: #{numformer_forward.10} parent=0 // pred_fallthru
    _

// kernel: numformer_forward.11
$region0: #{numformer_forward.11}
  #allocation0 [shape = 'u32[]', space=smem, size = 0x4, offset = 0x4, fixed_abs, tag = 'smem constant byte address 0x4 - core index']
  #allocation1 [shape = 'u32[144,128]{1,0:T(1,128)}', space=vmem, size = 0x12000, scoped, tag = 'internal scratch']
  %s0 = inlined_call_operand.vmem [shape: f32[2,8,192], index: 0, kind: input, shape index: {}]
  %s1 = inlined_call_operand.vmem [shape: f32[2,8,64], index: 1, kind: input, shape index: {}]
  %s2 = inlined_call_operand.vmem [shape: bf16[64,64], index: 2, kind: input, shape index: {}]
  %s3 = inlined_call_operand.vmem [shape: f32[1,64], index: 3, kind: input, shape index: {}]
  %s4 = inlined_call_operand.vmem [shape: f32[2,8,64], index: 4, kind: output, shape index: {}]
  %s5 = sld [smem:[#allocation0]]
  $region49: #{numformer_forward.11} parent=0
    _
  %s7 = ssub.s32 1, %s5
  %s8 = scalar_select 0, %s7, %s5
  loop: start=0, step=1, limit=4
  $region2: #{numformer_forward.11} parent=0 // loop_pre_header
    _
  $region3: #{numformer_forward.11} parent=0 // loop_header
    %s10 = sphi 0, %s14
    %p11 = scmp.ge.s32.totalorder %s10, 4
    %s20 = sphi 0, %s22
    %s23 = sphi 0, %s20
    %s24 = sphi 0, %s23
    %s40 = sphi 0, %s24
    %s46 = sphi 0, %s48
    %s49 = sphi 0, %s46
    %s50 = sphi 0, %s49
    %s66 = sphi 0, %s50
    %s70 = sphi 0, %s70
    %s72 = sphi 0, %s70
    %s73 = sphi 0, %s72
    %s87 = sphi 0, %s73
    %s91 = sphi 0, %s91
    %s93 = sphi 0, %s91
    %s94 = sphi 0, %s93
    %s108 = sphi 0, %s94
    %s114 = sphi 0, %s116
    %s117 = sphi 0, %s114
    %s118 = sphi 0, %s117
    %s134 = sphi 0, %s118
  $region4: #{numformer_forward.11} parent=0 // loop_header_branch
    %13 = sbr.rel (%p11) target = $region8
  $region5: #{numformer_forward.11} parent=0 // loop_body
    %s15 = ssub.s32 %s10, 1
    %s16 = ssub.s32 %s10, 2
    %s17 = sadd.s32 %s10, 1
    %s18 = ssub.s32 %s10, %s17
    %p19 = scmp.eq.s32.totalorder %s18, 0
    %s21 = sadd.s32 %s20, 1
    %s22 = scalar_select %p19, %s20, %s21
    %p25 = pneg %p19
    %p26 = scmp.eq.s32.totalorder %s10, 1
    %p27 = por %p25, %p26
    %p28 = scmp.ne.s32.totalorder %s20, %s23
    %p29 = scmp.eq.s32.totalorder %s10, 0
    %p30 = por %p28, %p29
    %p31 = scmp.ne.s32.totalorder %s20, %s23
    %p32 = scmp.eq.s32.totalorder %s15, 1
    %p33 = por %p31, %p32
    %p34 = scmp.ne.s32.totalorder %s23, %s24
    %p35 = scmp.eq.s32.totalorder %s15, 0
    %p36 = por %p34, %p35
    %p37 = scmp.ne.s32.totalorder %s23, %s24
    %p38 = scmp.eq.s32.totalorder %s16, 1
    %p39 = por %p37, %p38
    %p41 = scmp.ne.s32.totalorder %s24, %s40
    %p42 = scmp.eq.s32.totalorder %s16, 0
    %p43 = por %p41, %p42
    %s44 = ssub.s32 %s10, %s17
    %p45 = scmp.eq.s32.totalorder %s44, 0
    %s47 = sadd.s32 %s46, 1
    %s48 = scalar_select %p45, %s46, %s47
    %p51 = pneg %p45
    %p52 = scmp.eq.s32.totalorder %s10, 1
    %p53 = por %p51, %p52
    %p54 = scmp.ne.s32.totalorder %s46, %s49
    %p55 = scmp.eq.s32.totalorder %s10, 0
    %p56 = por %p54, %p55
    %p57 = scmp.ne.s32.totalorder %s46, %s49
    %p58 = scmp.eq.s32.totalorder %s15, 1
    %p59 = por %p57, %p58
    %p60 = scmp.ne.s32.totalorder %s49, %s50
    %p61 = scmp.eq.s32.totalorder %s15, 0
    %p62 = por %p60, %p61
    %p63 = scmp.ne.s32.totalorder %s49, %s50
    %p64 = scmp.eq.s32.totalorder %s16, 1
    %p65 = por %p63, %p64
    %p67 = scmp.ne.s32.totalorder %s50, %s66
    %p68 = scmp.eq.s32.totalorder %s16, 0
    %p69 = por %p67, %p68
    %s71 = sadd.s32 %s70, 1
    %p74 = scmp.eq.s32.totalorder %s10, 1
    %p75 = scmp.ne.s32.totalorder %s70, %s72
    %p76 = scmp.eq.s32.totalorder %s10, 0
    %p77 = por %p75, %p76
    %p78 = scmp.ne.s32.totalorder %s70, %s72
    %p79 = scmp.eq.s32.totalorder %s15, 1
    %p80 = por %p78, %p79
    %p81 = scmp.ne.s32.totalorder %s72, %s73
    %p82 = scmp.eq.s32.totalorder %s15, 0
    %p83 = por %p81, %p82
    %p84 = scmp.ne.s32.totalorder %s72, %s73
    %p85 = scmp.eq.s32.totalorder %s16, 1
    %p86 = por %p84, %p85
    %p88 = scmp.ne.s32.totalorder %s73, %s87
    %p89 = scmp.eq.s32.totalorder %s16, 0
    %p90 = por %p88, %p89
    %s92 = sadd.s32 %s91, 1
    %p95 = scmp.eq.s32.totalorder %s10, 1
    %p96 = scmp.ne.s32.totalorder %s91, %s93
    %p97 = scmp.eq.s32.totalorder %s10, 0
    %p98 = por %p96, %p97
    %p99 = scmp.ne.s32.totalorder %s91, %s93
    %p100 = scmp.eq.s32.totalorder %s15, 1
    %p101 = por %p99, %p100
    %p102 = scmp.ne.s32.totalorder %s93, %s94
    %p103 = scmp.eq.s32.totalorder %s15, 0
    %p104 = por %p102, %p103
    %p105 = scmp.ne.s32.totalorder %s93, %s94
    %p106 = scmp.eq.s32.totalorder %s16, 1
    %p107 = por %p105, %p106
    %p109 = scmp.ne.s32.totalorder %s94, %s108
    %p110 = scmp.eq.s32.totalorder %s16, 0
    %p111 = por %p109, %p110
    %s112 = ssub.s32 %s10, %s17
    %p113 = scmp.eq.s32.totalorder %s112, 0
    %s115 = sadd.s32 %s114, 1
    %s116 = scalar_select %p113, %s114, %s115
    %p119 = pneg %p113
    %p120 = scmp.eq.s32.totalorder %s10, 1
    %p121 = por %p119, %p120
    %p122 = scmp.ne.s32.totalorder %s114, %s117
    %p123 = scmp.eq.s32.totalorder %s10, 0
    %p124 = por %p122, %p123
    %p125 = scmp.ne.s32.totalorder %s114, %s117
    %p126 = scmp.eq.s32.totalorder %s15, 1
    %p127 = por %p125, %p126
    %p128 = scmp.ne.s32.totalorder %s117, %s118
    %p129 = scmp.eq.s32.totalorder %s15, 0
    %p130 = por %p128, %p129
    %p131 = scmp.ne.s32.totalorder %s117, %s118
    %p132 = scmp.eq.s32.totalorder %s16, 1
    %p133 = por %p131, %p132
    %p135 = scmp.ne.s32.totalorder %s118, %s134
    %p136 = scmp.eq.s32.totalorder %s16, 0
    %p137 = por %p135, %p136
    %p138 = scmp.le.s32.totalorder 1, %s10
    %p139 = scmp.lt.s32.totalorder %s10, 3
    %p140 = pnand %p138, %p139
    %p141 = pneg %p140
    // Predicated region
    $region9: #{numformer_forward.11} parent=5 // pred_check
      _
    $region10: #{numformer_forward.11} parent=5 // pred_check_branch
      %143 = sbr.rel (%p140) target = $region12
    $region11: #{numformer_forward.11} parent=5 // pred_region
      %s144 = ssub.s32 %s10, 1
      // Predicated region
      $region13: #{numformer_forward.11} parent=11 // pred_check
        %p145 = pneg %p83
      $region14: #{numformer_forward.11} parent=11 // pred_check_branch
        %147 = sbr.rel (%p145) target = $region16
      $region15: #{numformer_forward.11} parent=11 // pred_region
        _
      $region16: #{numformer_forward.11} parent=11 // pred_fallthru
        _
      // Predicated region
      $region17: #{numformer_forward.11} parent=11 // pred_check
        %p148 = pneg %p104
      $region18: #{numformer_forward.11} parent=11 // pred_check_branch
        %150 = sbr.rel (%p148) target = $region20
      $region19: #{numformer_forward.11} parent=11 // pred_region
        _
      $region20: #{numformer_forward.11} parent=11 // pred_fallthru
        _
    $region12: #{numformer_forward.11} parent=5 // pred_fallthru
      _
    %p151 = scmp.lt.s32.totalorder %s10, 2
    // Predicated region
    $region21: #{numformer_forward.11} parent=5 // pred_check
      %p152 = pneg %p151
    $region22: #{numformer_forward.11} parent=5 // pred_check_branch
      %154 = sbr.rel (%p152) target = $region24
    $region23: #{numformer_forward.11} parent=5 // pred_region
      // Predicated region
      $region25: #{numformer_forward.11} parent=23 // pred_check
        %p155 = pneg %p30
      $region26: #{numformer_forward.11} parent=23 // pred_check_branch
        %157 = sbr.rel (%p155) target = $region28
      $region27: #{numformer_forward.11} parent=23 // pred_region
        %p158 = scmp.lt.s32.totalorder %s10, 1
        %s159 = scalar_select %p158, %s10, 1
        %s160 = smul.addr %s159, 2
        %s161 = smul.addr %s160, 8
        %s162 = scalar_lea.vmem %s0, %s161
      $region28: #{numformer_forward.11} parent=23 // pred_fallthru
        _
      // Predicated region
      $region29: #{numformer_forward.11} parent=23 // pred_check
        %p163 = pneg %p56
      $region30: #{numformer_forward.11} parent=23 // pred_check_branch
        %165 = sbr.rel (%p163) target = $region32
      $region31: #{numformer_forward.11} parent=23 // pred_region
        %p166 = scmp.lt.s32.totalorder %s10, 1
        %s167 = scalar_select %p166, %s10, 1
        %s168 = smul.addr %s167, 8
        %s169 = scalar_lea.vmem %s1, %s168
      $region32: #{numformer_forward.11} parent=23 // pred_fallthru
        _
    $region24: #{numformer_forward.11} parent=5 // pred_fallthru
      _
    %p170 = scmp.le.s32.totalorder 1, %s10
    %p171 = scmp.lt.s32.totalorder %s10, 3
    %p172 = pnand %p170, %p171
    %p173 = pneg %p172
    // Predicated region
    $region33: #{numformer_forward.11} parent=5 // pred_check
      _
    $region34: #{numformer_forward.11} parent=5 // pred_check_branch
      %175 = sbr.rel (%p172) target = $region36
    $region35: #{numformer_forward.11} parent=5 // pred_region
      %s176 = ssub.s32 %s10, 1
      %p177 = scmp.lt.s32.totalorder %s15, 1
      %s178 = scalar_select %p177, %s15, 1
      %s179 = smul.addr %s178, 2
      %s180 = smul.addr %s179, 8
      %s181 = scalar_lea.vmem %s0, %s180
      %p182 = pneg %p36
      %p183 = pneg %p33
      %p184 = scmp.lt.s32.totalorder %s15, 1
      %s185 = scalar_select %p184, %s15, 1
      %s186 = smul.addr %s185, 8
      %s187 = scalar_lea.vmem %s1, %s186
      %p188 = pneg %p62
      %p189 = pneg %p59
      %p190 = pneg %p83
      %p191 = pneg %p80
      %p192 = pneg %p104
      %p193 = pneg %p101
      %p194 = pneg %p130
      %p195 = pneg %p127
      %p196 = scmp.lt.s32.totalorder %s15, 1
      %s197 = scalar_select %p196, %s15, 1
      %s198 = smul.addr %s197, 8
      %s199 = scalar_lea.vmem %s4, %s198
      %p200 = scmp.lt.s32.totalorder %s15, 1
      %s201 = scalar_select %p200, %s15, 1
      %s202 = smul.addr %s201, 2
      %s203 = smul.addr %s202, 8
      %s204 = scalar_lea.vmem %s0, %s203
      %p205 = scmp.lt.s32.totalorder %s15, 1
      %s206 = scalar_select %p205, %s15, 1
      %s207 = smul.addr %s206, 8
      %s208 = scalar_lea.vmem %s1, %s207
      %p209 = scmp.lt.s32.totalorder %s15, 1
      %s210 = scalar_select %p209, %s15, 1
      %s211 = smul.addr %s210, 8
      %s212 = scalar_lea.vmem %s4, %s211
      %v214 = vld [vmem:[%s204] sm:$0xff]
      %v215 = vld [vmem:[%s204 + $0x8] sm:$0xff]
      %v216 = vpack.c.bf16 %v214, %v214
      %218 = vrot.lane.b32.xlu0 %v216, 64
      %v219 = vpop.permute.xlu0 %218
      %vm220 = vcmask 130048
      %v222 = vsel %vm220, %v216, 0
      %v225 = vsel %vm220, %v219, 0
      %227 = vmatprep.subr.bf16.mxu0 0
      %228 = vmatpush1.bf16.xpose.msra.mxu0 %v225
      %229 = vmatprep.subr.bf16.mxu0 0
      %230 = vmatpush1.bf16.xpose.msra.mxu0 0
      %231 = vmatprep.subr.bf16.mxu0 0
      %232 = vmatpush1.bf16.xpose.msra.mxu0 0
      %233 = vmatprep.subr.bf16.mxu0 0
      %234 = vmatpush1.bf16.xpose.msra.mxu0 0
      %235 = vmatprep.subr.bf16.mxu0 0
      %236 = vmatpush1.bf16.xpose.msra.mxu0 0
      %237 = vmatprep.subr.bf16.mxu0 0
      %238 = vmatpush1.bf16.xpose.msra.mxu0 0
      %239 = vmatprep.subr.bf16.mxu0 0
      %240 = vmatpush1.bf16.xpose.msra.mxu0 0
      %241 = vmatprep.subr.bf16.mxu0 0
      %242 = vmatpush1.bf16.xpose.msra.mxu0 0
      %243 = vmatprep.subr.bf16.mxu0 0
      %244 = vmatpush1.bf16.xpose.msra.mxu0 0
      %245 = vmatprep.subr.bf16.mxu0 0
      %246 = vmatpush1.bf16.xpose.msra.mxu0 0
      %247 = vmatprep.subr.bf16.mxu0 0
      %248 = vmatpush1.bf16.xpose.msra.mxu0 0
      %249 = vmatprep.subr.bf16.mxu0 0
      %250 = vmatpush1.bf16.xpose.msra.mxu0 0
      %251 = vmatprep.subr.bf16.mxu0 0
      %252 = vmatpush1.bf16.xpose.msra.mxu0 0
      %253 = vmatprep.subr.bf16.mxu0 0
      %254 = vmatpush1.bf16.xpose.msra.mxu0 0
      %255 = vmatprep.subr.bf16.mxu0 0
      %256 = vmatpush1.bf16.xpose.msra.mxu0 0
      %257 = vmatprep.subr.bf16.mxu0 0
      %258 = vmatpush1.bf16.xpose.msra.mxu0 0
      %259 = vmatprep.mubr.bf16.mxu0 0
      %260 = vmatmul.mubr.bf16.gmra.mrb[0].mxu0 %v222
      %v261 = vpop.f32.mrb[0].mxu0
      %v262 = vadd.f32 0.0, %v261
      %v263 = vpop.f32.mrb[0].mxu0
      %v264 = vpop.f32.mrb[0].mxu0
      %v265 = vpop.f32.mrb[0].mxu0
      %266 = vdwg.mxu0
      %v267 = vmul.f32 %v262, 0.25
      %vm268 = vcmask 64512
      %v269 = vsel %vm268, %v267, -inf
      %270 = vmax.xlane.f32.xlu0 %v269
      %v271 = vpop.xlane.xlu0 %270
      %v272 = vsub.f32 %v267, %v271
      %v273 = vmul.f32 %v272, 1.442695
      %v274 = vpow.pop %v273
      %v275 = vsel %vm268, %v274, 0.0
      %276 = vadd.xlane.f32.xlu0 %v275
      %v277 = vpop.xlane.xlu0 %276
      %v278 = vrcp.pop %v277
      %v279 = vmul.f32 %v274, %v278
      %v280 = vpack.c.bf16 %v279, %v279
      %v281 = vpack.c.bf16 %v215, %v215
      %v283 = vsel %vm268, %v280, 0
      %vm285 = vcmask 1043456
      %v287 = vsel %vm285, %v281, 0
      %289 = vmatprep.subr.bf16.mxu0 0
      %290 = vmatpush1.bf16.msra.mxu0 %v287
      %291 = vmatprep.subr.bf16.mxu0 0
      %292 = vmatpush1.bf16.msra.mxu0 0
      %293 = vmatprep.subr.bf16.mxu0 0
      %294 = vmatpush1.bf16.msra.mxu0 0
      %295 = vmatprep.subr.bf16.mxu0 0
      %296 = vmatpush1.bf16.msra.mxu0 0
      %297 = vmatprep.subr.bf16.mxu0 0
      %298 = vmatpush1.bf16.msra.mxu0 0
      %299 = vmatprep.subr.bf16.mxu0 0
      %300 = vmatpush1.bf16.msra.mxu0 0
      %301 = vmatprep.subr.bf16.mxu0 0
      %302 = vmatpush1.bf16.msra.mxu0 0
      %303 = vmatprep.subr.bf16.mxu0 0
      %304 = vmatpush1.bf16.msra.mxu0 0
      %305 = vmatprep.subr.bf16.mxu0 0
      %306 = vmatpush1.bf16.msra.mxu0 0
      %307 = vmatprep.subr.bf16.mxu0 0
      %308 = vmatpush1.bf16.msra.mxu0 0
      %309 = vmatprep.subr.bf16.mxu0 0
      %310 = vmatpush1.bf16.msra.mxu0 0
      %311 = vmatprep.subr.bf16.mxu0 0
      %312 = vmatpush1.bf16.msra.mxu0 0
      %313 = vmatprep.subr.bf16.mxu0 0
      %314 = vmatpush1.bf16.msra.mxu0 0
      %315 = vmatprep.subr.bf16.mxu0 0
      %316 = vmatpush1.bf16.msra.mxu0 0
      %317 = vmatprep.subr.bf16.mxu0 0
      %318 = vmatpush1.bf16.msra.mxu0 0
      %319 = vmatprep.subr.bf16.mxu0 0
      %320 = vmatpush1.bf16.msra.mxu0 0
      %321 = vmatprep.mubr.bf16.mxu0 0
      %322 = vmatmul.mubr.bf16.gmra.mrb[0].mxu0 %v283
      %v323 = vpop.f32.mrb[0].mxu0
      %v324 = vadd.f32 0.0, %v323
      %v325 = vpop.f32.mrb[0].mxu0
      %v326 = vpop.f32.mrb[0].mxu0
      %v327 = vpop.f32.mrb[0].mxu0
      %328 = vdwg.mxu0
      %v329 = vpack.c.bf16 %v324, %v324
      %v330 = vld [vmem:[%s2] sm:$0xf]
      %v331 = vld [vmem:[%s2 + $0x4] sm:$0xf]
      %332 = vrot.lane.b32.xlu0 %v216, 112
      %v333 = vpop.permute.xlu0 %332
      %334 = vrot.lane.b32.xlu0 %v216, 48
      %v335 = vpop.permute.xlu0 %334
      %v337 = vsel %vm220, %v333, 0
      %v340 = vsel %vm220, %v335, 0
      %342 = vmatprep.subr.bf16.mxu0 0
      %343 = vmatpush1.bf16.xpose.msra.mxu0 %v340
      %344 = vmatprep.subr.bf16.mxu0 0
      %345 = vmatpush1.bf16.xpose.msra.mxu0 0
      %346 = vmatprep.subr.bf16.mxu0 0
      %347 = vmatpush1.bf16.xpose.msra.mxu0 0
      %348 = vmatprep.subr.bf16.mxu0 0
      %349 = vmatpush1.bf16.xpose.msra.mxu0 0
      %350 = vmatprep.subr.bf16.mxu0 0
      %351 = vmatpush1.bf16.xpose.msra.mxu0 0
      %352 = vmatprep.subr.bf16.mxu0 0
      %353 = vmatpush1.bf16.xpose.msra.mxu0 0
      %354 = vmatprep.subr.bf16.mxu0 0
      %355 = vmatpush1.bf16.xpose.msra.mxu0 0
      %356 = vmatprep.subr.bf16.mxu0 0
      %357 = vmatpush1.bf16.xpose.msra.mxu0 0
      %358 = vmatprep.subr.bf16.mxu0 0
      %359 = vmatpush1.bf16.xpose.msra.mxu0 0
      %360 = vmatprep.subr.bf16.mxu0 0
      %361 = vmatpush1.bf16.xpose.msra.mxu0 0
      %362 = vmatprep.subr.bf16.mxu0 0
      %363 = vmatpush1.bf16.xpose.msra.mxu0 0
      %364 = vmatprep.subr.bf16.mxu0 0
      %365 = vmatpush1.bf16.xpose.msra.mxu0 0
      %366 = vmatprep.subr.bf16.mxu0 0
      %367 = vmatpush1.bf16.xpose.msra.mxu0 0
      %368 = vmatprep.subr.bf16.mxu0 0
      %369 = vmatpush1.bf16.xpose.msra.mxu0 0
      %370 = vmatprep.subr.bf16.mxu0 0
      %371 = vmatpush1.bf16.xpose.msra.mxu0 0
      %372 = vmatprep.subr.bf16.mxu0 0
      %373 = vmatpush1.bf16.xpose.msra.mxu0 0
      %374 = vmatprep.mubr.bf16.mxu0 0
      %375 = vmatmul.mubr.bf16.gmra.mrb[0].mxu0 %v337
      %v376 = vpop.f32.mrb[0].mxu0
      %v377 = vadd.f32 0.0, %v376
      %v378 = vpop.f32.mrb[0].mxu0
      %v379 = vpop.f32.mrb[0].mxu0
      %v380 = vpop.f32.mrb[0].mxu0
      %381 = vdwg.mxu0
      %v382 = vmul.f32 %v377, 0.25
      %v383 = vsel %vm268, %v382, -inf
      %384 = vmax.xlane.f32.xlu0 %v383
      %v385 = vpop.xlane.xlu0 %384
      %v386 = vsub.f32 %v382, %v385
      %v387 = vmul.f32 %v386, 1.442695
      %v388 = vpow.pop %v387
      %v389 = vsel %vm268, %v388, 0.0
      %390 = vadd.xlane.f32.xlu0 %v389
      %v391 = vpop.xlane.xlu0 %390
      %v392 = vrcp.pop %v391
      %v393 = vmul.f32 %v388, %v392
      %v394 = vpack.c.bf16 %v393, %v393
      %396 = vrot.lane.b32.xlu0 %v281, 112
      %v397 = vpop.permute.xlu0 %396
      %v399 = vsel %vm268, %v394, 0
      %v402 = vsel %vm285, %v397, 0
      %404 = vmatprep.subr.bf16.mxu0 0
      %405 = vmatpush1.bf16.msra.mxu0 %v402
      %406 = vmatprep.subr.bf16.mxu0 0
      %407 = vmatpush1.bf16.msra.mxu0 0
      %408 = vmatprep.subr.bf16.mxu0 0
      %409 = vmatpush1.bf16.msra.mxu0 0
      %410 = vmatprep.subr.bf16.mxu0 0
      %411 = vmatpush1.bf16.msra.mxu0 0
      %412 = vmatprep.subr.bf16.mxu0 0
      %413 = vmatpush1.bf16.msra.mxu0 0
      %414 = vmatprep.subr.bf16.mxu0 0
      %415 = vmatpush1.bf16.msra.mxu0 0
      %416 = vmatprep.subr.bf16.mxu0 0
      %417 = vmatpush1.bf16.msra.mxu0 0
      %418 = vmatprep.subr.bf16.mxu0 0
      %419 = vmatpush1.bf16.msra.mxu0 0
      %420 = vmatprep.subr.bf16.mxu0 0
      %421 = vmatpush1.bf16.msra.mxu0 0
      %422 = vmatprep.subr.bf16.mxu0 0
      %423 = vmatpush1.bf16.msra.mxu0 0
      %424 = vmatprep.subr.bf16.mxu0 0
      %425 = vmatpush1.bf16.msra.mxu0 0
      %426 = vmatprep.subr.bf16.mxu0 0
      %427 = vmatpush1.bf16.msra.mxu0 0
      %428 = vmatprep.subr.bf16.mxu0 0
      %429 = vmatpush1.bf16.msra.mxu0 0
      %430 = vmatprep.subr.bf16.mxu0 0
      %431 = vmatpush1.bf16.msra.mxu0 0
      %432 = vmatprep.subr.bf16.mxu0 0
      %433 = vmatpush1.bf16.msra.mxu0 0
      %434 = vmatprep.subr.bf16.mxu0 0
      %435 = vmatpush1.bf16.msra.mxu0 0
      %436 = vmatprep.mubr.bf16.mxu0 0
      %437 = vmatmul.mubr.bf16.gmra.mrb[0].mxu0 %v399
      %v438 = vpop.f32.mrb[0].mxu0
      %v439 = vadd.f32 0.0, %v438
      %v440 = vpop.f32.mrb[0].mxu0
      %v441 = vpop.f32.mrb[0].mxu0
      %v442 = vpop.f32.mrb[0].mxu0
      %443 = vdwg.mxu0
      %v444 = vpack.c.bf16 %v439, %v439
      %v445 = vld [vmem:[%s2 + $0x8] sm:$0xf]
      %v446 = vld [vmem:[%s2 + $0xc] sm:$0xf]
      %v449 = vunpack.c.l.b16 %v445
      %v450 = vunpack.c.l.b16 %v446
      %v451 = vpack.c.b16 %v450, %v449
      %v454 = vsel %vm220, %v444, 0
      %456 = vmatprep.subr.bf16.mxu0 0
      %457 = vmatpush1.bf16.msra.mxu0 %v451
      %458 = vmatprep.subr.bf16.mxu0 0
      %459 = vmatpush1.bf16.msra.mxu0 0
      %460 = vmatprep.subr.bf16.mxu0 0
      %461 = vmatpush1.bf16.msra.mxu0 0
      %462 = vmatprep.subr.bf16.mxu0 0
      %463 = vmatpush1.bf16.msra.mxu0 0
      %464 = vmatprep.subr.bf16.mxu0 0
      %465 = vmatpush1.bf16.msra.mxu0 0
      %466 = vmatprep.subr.bf16.mxu0 0
      %467 = vmatpush1.bf16.msra.mxu0 0
      %468 = vmatprep.subr.bf16.mxu0 0
      %469 = vmatpush1.bf16.msra.mxu0 0
      %470 = vmatprep.subr.bf16.mxu0 0
      %471 = vmatpush1.bf16.msra.mxu0 0
      %472 = vmatprep.subr.bf16.mxu0 0
      %473 = vmatpush1.bf16.msra.mxu0 0
      %474 = vmatprep.subr.bf16.mxu0 0
      %475 = vmatpush1.bf16.msra.mxu0 0
      %476 = vmatprep.subr.bf16.mxu0 0
      %477 = vmatpush1.bf16.msra.mxu0 0
      %478 = vmatprep.subr.bf16.mxu0 0
      %479 = vmatpush1.bf16.msra.mxu0 0
      %480 = vmatprep.subr.bf16.mxu0 0
      %481 = vmatpush1.bf16.msra.mxu0 0
      %482 = vmatprep.subr.bf16.mxu0 0
      %483 = vmatpush1.bf16.msra.mxu0 0
      %484 = vmatprep.subr.bf16.mxu0 0
      %485 = vmatpush1.bf16.msra.mxu0 0
      %486 = vmatprep.subr.bf16.mxu0 0
      %487 = vmatpush1.bf16.msra.mxu0 0
      %488 = vmatprep.mubr.bf16.mxu0 0
      %489 = vmatmul.mubr.bf16.gmra.mrb[0].mxu0 %v454
      %v490 = vpop.f32.mrb[0].mxu0
      %v491 = vadd.f32 0.0, %v490
      %v492 = vpop.f32.mrb[0].mxu0
      %v493 = vpop.f32.mrb[0].mxu0
      %v494 = vpop.f32.mrb[0].mxu0
      %495 = vdwg.mxu0
      %v498 = vunpack.c.l.b16 %v330
      %v499 = vunpack.c.l.b16 %v331
      %v500 = vpack.c.b16 %v499, %v498
      %v503 = vsel %vm220, %v329, 0
      %505 = vmatprep.subr.bf16.mxu0 0
      %506 = vmatpush1.bf16.msra.mxu0 %v500
      %507 = vmatprep.subr.bf16.mxu0 0
      %508 = vmatpush1.bf16.msra.mxu0 0
      %509 = vmatprep.subr.bf16.mxu0 0
      %510 = vmatpush1.bf16.msra.mxu0 0
      %511 = vmatprep.subr.bf16.mxu0 0
      %512 = vmatpush1.bf16.msra.mxu0 0
      %513 = vmatprep.subr.bf16.mxu0 0
      %514 = vmatpush1.bf16.msra.mxu0 0
      %515 = vmatprep.subr.bf16.mxu0 0
      %516 = vmatpush1.bf16.msra.mxu0 0
      %517 = vmatprep.subr.bf16.mxu0 0
      %518 = vmatpush1.bf16.msra.mxu0 0
      %519 = vmatprep.subr.bf16.mxu0 0
      %520 = vmatpush1.bf16.msra.mxu0 0
      %521 = vmatprep.subr.bf16.mxu0 0
      %522 = vmatpush1.bf16.msra.mxu0 0
      %523 = vmatprep.subr.bf16.mxu0 0
      %524 = vmatpush1.bf16.msra.mxu0 0
      %525 = vmatprep.subr.bf16.mxu0 0
      %526 = vmatpush1.bf16.msra.mxu0 0
      %527 = vmatprep.subr.bf16.mxu0 0
      %528 = vmatpush1.bf16.msra.mxu0 0
      %529 = vmatprep.subr.bf16.mxu0 0
      %530 = vmatpush1.bf16.msra.mxu0 0
      %531 = vmatprep.subr.bf16.mxu0 0
      %532 = vmatpush1.bf16.msra.mxu0 0
      %533 = vmatprep.subr.bf16.mxu0 0
      %534 = vmatpush1.bf16.msra.mxu0 0
      %535 = vmatprep.subr.bf16.mxu0 0
      %536 = vmatpush1.bf16.msra.mxu0 0
      %537 = vmatprep.mubr.bf16.mxu0 0
      %538 = vmatmul.mubr.bf16.gmra.mrb[0].mxu0 %v503
      %v539 = vpop.f32.mrb[0].mxu0
      %v540 = vadd.f32 %v491, %v539
      %v541 = vpop.f32.mrb[0].mxu0
      %v542 = vpop.f32.mrb[0].mxu0
      %v543 = vpop.f32.mrb[0].mxu0
      %544 = vdwg.mxu0
      %545 = vrot.lane.b32.xlu0 %v216, 96
      %v546 = vpop.permute.xlu0 %545
      %547 = vrot.lane.b32.xlu0 %v216, 32
      %v548 = vpop.permute.xlu0 %547
      %v550 = vsel %vm220, %v546, 0
      %v553 = vsel %vm220, %v548, 0
      %555 = vmatprep.subr.bf16.mxu0 0
      %556 = vmatpush1.bf16.xpose.msra.mxu0 %v553
      %557 = vmatprep.subr.bf16.mxu0 0
      %558 = vmatpush1.bf16.xpose.msra.mxu0 0
      %559 = vmatprep.subr.bf16.mxu0 0
      %560 = vmatpush1.bf16.xpose.msra.mxu0 0
      %561 = vmatprep.subr.bf16.mxu0 0
      %562 = vmatpush1.bf16.xpose.msra.mxu0 0
      %563 = vmatprep.subr.bf16.mxu0 0
      %564 = vmatpush1.bf16.xpose.msra.mxu0 0
      %565 = vmatprep.subr.bf16.mxu0 0
      %566 = vmatpush1.bf16.xpose.msra.mxu0 0
      %567 = vmatprep.subr.bf16.mxu0 0
      %568 = vmatpush1.bf16.xpose.msra.mxu0 0
      %569 = vmatprep.subr.bf16.mxu0 0
      %570 = vmatpush1.bf16.xpose.msra.mxu0 0
      %571 = vmatprep.subr.bf16.mxu0 0
      %572 = vmatpush1.bf16.xpose.msra.mxu0 0
      %573 = vmatprep.subr.bf16.mxu0 0
      %574 = vmatpush1.bf16.xpose.msra.mxu0 0
      %575 = vmatprep.subr.bf16.mxu0 0
      %576 = vmatpush1.bf16.xpose.msra.mxu0 0
      %577 = vmatprep.subr.bf16.mxu0 0
      %578 = vmatpush1.bf16.xpose.msra.mxu0 0
      %579 = vmatprep.subr.bf16.mxu0 0
      %580 = vmatpush1.bf16.xpose.msra.mxu0 0
      %581 = vmatprep.subr.bf16.mxu0 0
      %582 = vmatpush1.bf16.xpose.msra.mxu0 0
      %583 = vmatprep.subr.bf16.mxu0 0
      %584 = vmatpush1.bf16.xpose.msra.mxu0 0
      %585 = vmatprep.subr.bf16.mxu0 0
      %586 = vmatpush1.bf16.xpose.msra.mxu0 0
      %587 = vmatprep.mubr.bf16.mxu0 0
      %588 = vmatmul.mubr.bf16.gmra.mrb[0].mxu0 %v550
      %v589 = vpop.f32.mrb[0].mxu0
      %v590 = vadd.f32 0.0, %v589
      %v591 = vpop.f32.mrb[0].mxu0
      %v592 = vpop.f32.mrb[0].mxu0
      %v593 = vpop.f32.mrb[0].mxu0
      %594 = vdwg.mxu0
      %v595 = vmul.f32 %v590, 0.25
      %v596 = vsel %vm268, %v595, -inf
      %597 = vmax.xlane.f32.xlu0 %v596
      %v598 = vpop.xlane.xlu0 %597
      %v599 = vsub.f32 %v595, %v598
      %v600 = vmul.f32 %v599, 1.442695
      %v601 = vpow.pop %v600
      %v602 = vsel %vm268, %v601, 0.0
      %603 = vadd.xlane.f32.xlu0 %v602
      %v604 = vpop.xlane.xlu0 %603
      %v605 = vrcp.pop %v604
      %v606 = vmul.f32 %v601, %v605
      %v607 = vpack.c.bf16 %v606, %v606
      %608 = vrot.lane.b32.xlu0 %v281, 96
      %v609 = vpop.permute.xlu0 %608
      %v611 = vsel %vm268, %v607, 0
      %v614 = vsel %vm285, %v609, 0
      %616 = vmatprep.subr.bf16.mxu0 0
      %617 = vmatpush1.bf16.msra.mxu0 %v614
      %618 = vmatprep.subr.bf16.mxu0 0
      %619 = vmatpush1.bf16.msra.mxu0 0
      %620 = vmatprep.subr.bf16.mxu0 0
      %621 = vmatpush1.bf16.msra.mxu0 0
      %622 = vmatprep.subr.bf16.mxu0 0
      %623 = vmatpush1.bf16.msra.mxu0 0
      %624 = vmatprep.subr.bf16.mxu0 0
      %625 = vmatpush1.bf16.msra.mxu0 0
      %626 = vmatprep.subr.bf16.mxu0 0
      %627 = vmatpush1.bf16.msra.mxu0 0
      %628 = vmatprep.subr.bf16.mxu0 0
      %629 = vmatpush1.bf16.msra.mxu0 0
      %630 = vmatprep.subr.bf16.mxu0 0
      %631 = vmatpush1.bf16.msra.mxu0 0
      %632 = vmatprep.subr.bf16.mxu0 0
      %633 = vmatpush1.bf16.msra.mxu0 0
      %634 = vmatprep.subr.bf16.mxu0 0
      %635 = vmatpush1.bf16.msra.mxu0 0
      %636 = vmatprep.subr.bf16.mxu0 0
      %637 = vmatpush1.bf16.msra.mxu0 0
      %638 = vmatprep.subr.bf16.mxu0 0
      %639 = vmatpush1.bf16.msra.mxu0 0
      %640 = vmatprep.subr.bf16.mxu0 0
      %641 = vmatpush1.bf16.msra.mxu0 0
      %642 = vmatprep.subr.bf16.mxu0 0
      %643 = vmatpush1.bf16.msra.mxu0 0
      %644 = vmatprep.subr.bf16.mxu0 0
      %645 = vmatpush1.bf16.msra.mxu0 0
      %646 = vmatprep.subr.bf16.mxu0 0
      %647 = vmatpush1.bf16.msra.mxu0 0
      %648 = vmatprep.mubr.bf16.mxu0 0
      %649 = vmatmul.mubr.bf16.gmra.mrb[0].mxu0 %v611
      %v650 = vpop.f32.mrb[0].mxu0
      %v651 = vadd.f32 0.0, %v650
      %v652 = vpop.f32.mrb[0].mxu0
      %v653 = vpop.f32.mrb[0].mxu0
      %v654 = vpop.f32.mrb[0].mxu0
      %655 = vdwg.mxu0
      %v656 = vpack.c.bf16 %v651, %v651
      %v657 = vld [vmem:[%s2 + $0x10] sm:$0xf]
      %v658 = vld [vmem:[%s2 + $0x14] sm:$0xf]
      %v661 = vunpack.c.l.b16 %v657
      %v662 = vunpack.c.l.b16 %v658
      %v663 = vpack.c.b16 %v662, %v661
      %v666 = vsel %vm220, %v656, 0
      %668 = vmatprep.subr.bf16.mxu0 0
      %669 = vmatpush1.bf16.msra.mxu0 %v663
      %670 = vmatprep.subr.bf16.mxu0 0
      %671 = vmatpush1.bf16.msra.mxu0 0
      %672 = vmatprep.subr.bf16.mxu0 0
      %673 = vmatpush1.bf16.msra.mxu0 0
      %674 = vmatprep.subr.bf16.mxu0 0
      %675 = vmatpush1.bf16.msra.mxu0 0
      %676 = vmatprep.subr.bf16.mxu0 0
      %677 = vmatpush1.bf16.msra.mxu0 0
      %678 = vmatprep.subr.bf16.mxu0 0
      %679 = vmatpush1.bf16.msra.mxu0 0
      %680 = vmatprep.subr.bf16.mxu0 0
      %681 = vmatpush1.bf16.msra.mxu0 0
      %682 = vmatprep.subr.bf16.mxu0 0
      %683 = vmatpush1.bf16.msra.mxu0 0
      %684 = vmatprep.subr.bf16.mxu0 0
      %685 = vmatpush1.bf16.msra.mxu0 0
      %686 = vmatprep.subr.bf16.mxu0 0
      %687 = vmatpush1.bf16.msra.mxu0 0
      %688 = vmatprep.subr.bf16.mxu0 0
      %689 = vmatpush1.bf16.msra.mxu0 0
      %690 = vmatprep.subr.bf16.mxu0 0
      %691 = vmatpush1.bf16.msra.mxu0 0
      %692 = vmatprep.subr.bf16.mxu0 0
      %693 = vmatpush1.bf16.msra.mxu0 0
      %694 = vmatprep.subr.bf16.mxu0 0
      %695 = vmatpush1.bf16.msra.mxu0 0
      %696 = vmatprep.subr.bf16.mxu0 0
      %697 = vmatpush1.bf16.msra.mxu0 0
      %698 = vmatprep.subr.bf16.mxu0 0
      %699 = vmatpush1.bf16.msra.mxu0 0
      %700 = vmatprep.mubr.bf16.mxu0 0
      %701 = vmatmul.mubr.bf16.gmra.mrb[0].mxu0 %v666
      %v702 = vpop.f32.mrb[0].mxu0
      %v703 = vadd.f32 0.0, %v702
      %v704 = vpop.f32.mrb[0].mxu0
      %v705 = vpop.f32.mrb[0].mxu0
      %v706 = vpop.f32.mrb[0].mxu0
      %707 = vdwg.mxu0
      %v708 = vadd.f32 %v540, %v703
      %709 = vrot.lane.b32.xlu0 %v216, 80
      %v710 = vpop.permute.xlu0 %709
      %711 = vrot.lane.b32.xlu0 %v216, 16
      %v712 = vpop.permute.xlu0 %711
      %v714 = vsel %vm220, %v710, 0
      %v717 = vsel %vm220, %v712, 0
      %719 = vmatprep.subr.bf16.mxu0 0
      %720 = vmatpush1.bf16.xpose.msra.mxu0 %v717
      %721 = vmatprep.subr.bf16.mxu0 0
      %722 = vmatpush1.bf16.xpose.msra.mxu0 0
      %723 = vmatprep.subr.bf16.mxu0 0
      %724 = vmatpush1.bf16.xpose.msra.mxu0 0
      %725 = vmatprep.subr.bf16.mxu0 0
      %726 = vmatpush1.bf16.xpose.msra.mxu0 0
      %727 = vmatprep.subr.bf16.mxu0 0
      %728 = vmatpush1.bf16.xpose.msra.mxu0 0
      %729 = vmatprep.subr.bf16.mxu0 0
      %730 = vmatpush1.bf16.xpose.msra.mxu0 0
      %731 = vmatprep.subr.bf16.mxu0 0
      %732 = vmatpush1.bf16.xpose.msra.mxu0 0
      %733 = vmatprep.subr.bf16.mxu0 0
      %734 = vmatpush1.bf16.xpose.msra.mxu0 0
      %735 = vmatprep.subr.bf16.mxu0 0
      %736 = vmatpush1.bf16.xpose.msra.mxu0 0
      %737 = vmatprep.subr.bf16.mxu0 0
      %738 = vmatpush1.bf16.xpose.msra.mxu0 0
      %739 = vmatprep.subr.bf16.mxu0 0
      %740 = vmatpush1.bf16.xpose.msra.mxu0 0
      %741 = vmatprep.subr.bf16.mxu0 0
      %742 = vmatpush1.bf16.xpose.msra.mxu0 0
      %743 = vmatprep.subr.bf16.mxu0 0
      %744 = vmatpush1.bf16.xpose.msra.mxu0 0
      %745 = vmatprep.subr.bf16.mxu0 0
      %746 = vmatpush1.bf16.xpose.msra.mxu0 0
      %747 = vmatprep.subr.bf16.mxu0 0
      %748 = vmatpush1.bf16.xpose.msra.mxu0 0
      %749 = vmatprep.subr.bf16.mxu0 0
      %750 = vmatpush1.bf16.xpose.msra.mxu0 0
      %751 = vmatprep.mubr.bf16.mxu0 0
      %752 = vmatmul.mubr.bf16.gmra.mrb[0].mxu0 %v714
      %v753 = vpop.f32.mrb[0].mxu0
      %v754 = vadd.f32 0.0, %v753
      %v755 = vpop.f32.mrb[0].mxu0
      %v756 = vpop.f32.mrb[0].mxu0
      %v757 = vpop.f32.mrb[0].mxu0
      %758 = vdwg.mxu0
      %v759 = vmul.f32 %v754, 0.25
      %v760 = vsel %vm268, %v759, -inf
      %761 = vmax.xlane.f32.xlu0 %v760
      %v762 = vpop.xlane.xlu0 %761
      %v763 = vsub.f32 %v759, %v762
      %v764 = vmul.f32 %v763, 1.442695
      %v765 = vpow.pop %v764
      %v766 = vsel %vm268, %v765, 0.0
      %767 = vadd.xlane.f32.xlu0 %v766
      %v768 = vpop.xlane.xlu0 %767
      %v769 = vrcp.pop %v768
      %v770 = vmul.f32 %v765, %v769
      %v771 = vpack.c.bf16 %v770, %v770
      %772 = vrot.lane.b32.xlu0 %v281, 80
      %v773 = vpop.permute.xlu0 %772
      %v775 = vsel %vm268, %v771, 0
      %v778 = vsel %vm285, %v773, 0
      %780 = vmatprep.subr.bf16.mxu0 0
      %781 = vmatpush1.bf16.msra.mxu0 %v778
      %782 = vmatprep.subr.bf16.mxu0 0
      %783 = vmatpush1.bf16.msra.mxu0 0
      %784 = vmatprep.subr.bf16.mxu0 0
      %785 = vmatpush1.bf16.msra.mxu0 0
      %786 = vmatprep.subr.bf16.mxu0 0
      %787 = vmatpush1.bf16.msra.mxu0 0
      %788 = vmatprep.subr.bf16.mxu0 0
      %789 = vmatpush1.bf16.msra.mxu0 0
      %790 = vmatprep.subr.bf16.mxu0 0
      %791 = vmatpush1.bf16.msra.mxu0 0
      %792 = vmatprep.subr.bf16.mxu0 0
      %793 = vmatpush1.bf16.msra.mxu0 0
      %794 = vmatprep.subr.bf16.mxu0 0
      %795 = vmatpush1.bf16.msra.mxu0 0
      %796 = vmatprep.subr.bf16.mxu0 0
      %797 = vmatpush1.bf16.msra.mxu0 0
      %798 = vmatprep.subr.bf16.mxu0 0
      %799 = vmatpush1.bf16.msra.mxu0 0
      %800 = vmatprep.subr.bf16.mxu0 0
      %801 = vmatpush1.bf16.msra.mxu0 0
      %802 = vmatprep.subr.bf16.mxu0 0
      %803 = vmatpush1.bf16.msra.mxu0 0
      %804 = vmatprep.subr.bf16.mxu0 0
      %805 = vmatpush1.bf16.msra.mxu0 0
      %806 = vmatprep.subr.bf16.mxu0 0
      %807 = vmatpush1.bf16.msra.mxu0 0
      %808 = vmatprep.subr.bf16.mxu0 0
      %809 = vmatpush1.bf16.msra.mxu0 0
      %810 = vmatprep.subr.bf16.mxu0 0
      %811 = vmatpush1.bf16.msra.mxu0 0
      %812 = vmatprep.mubr.bf16.mxu0 0
      %813 = vmatmul.mubr.bf16.gmra.mrb[0].mxu0 %v775
      %v814 = vpop.f32.mrb[0].mxu0
      %v815 = vadd.f32 0.0, %v814
      %v816 = vpop.f32.mrb[0].mxu0
      %v817 = vpop.f32.mrb[0].mxu0
      %v818 = vpop.f32.mrb[0].mxu0
      %819 = vdwg.mxu0
      %v820 = vpack.c.bf16 %v815, %v815
      %v821 = vld [vmem:[%s2 + $0x18] sm:$0xf]
      %v822 = vld [vmem:[%s2 + $0x1c] sm:$0xf]
      %v825 = vunpack.c.l.b16 %v821
      %v826 = vunpack.c.l.b16 %v822
      %v827 = vpack.c.b16 %v826, %v825
      %v830 = vsel %vm220, %v820, 0
      %832 = vmatprep.subr.bf16.mxu0 0
      %833 = vmatpush1.bf16.msra.mxu0 %v827
      %834 = vmatprep.subr.bf16.mxu0 0
      %835 = vmatpush1.bf16.msra.mxu0 0
      %836 = vmatprep.subr.bf16.mxu0 0
      %837 = vmatpush1.bf16.msra.mxu0 0
      %838 = vmatprep.subr.bf16.mxu0 0
      %839 = vmatpush1.bf16.msra.mxu0 0
      %840 = vmatprep.subr.bf16.mxu0 0
      %841 = vmatpush1.bf16.msra.mxu0 0
      %842 = vmatprep.subr.bf16.mxu0 0
      %843 = vmatpush1.bf16.msra.mxu0 0
      %844 = vmatprep.subr.bf16.mxu0 0
      %845 = vmatpush1.bf16.msra.mxu0 0
      %846 = vmatprep.subr.bf16.mxu0 0
      %847 = vmatpush1.bf16.msra.mxu0 0
      %848 = vmatprep.subr.bf16.mxu0 0
      %849 = vmatpush1.bf16.msra.mxu0 0
      %850 = vmatprep.subr.bf16.mxu0 0
      %851 = vmatpush1.bf16.msra.mxu0 0
      %852 = vmatprep.subr.bf16.mxu0 0
      %853 = vmatpush1.bf16.msra.mxu0 0
      %854 = vmatprep.subr.bf16.mxu0 0
      %855 = vmatpush1.bf16.msra.mxu0 0
      %856 = vmatprep.subr.bf16.mxu0 0
      %857 = vmatpush1.bf16.msra.mxu0 0
      %858 = vmatprep.subr.bf16.mxu0 0
      %859 = vmatpush1.bf16.msra.mxu0 0
      %860 = vmatprep.subr.bf16.mxu0 0
      %861 = vmatpush1.bf16.msra.mxu0 0
      %862 = vmatprep.subr.bf16.mxu0 0
      %863 = vmatpush1.bf16.msra.mxu0 0
      %864 = vmatprep.mubr.bf16.mxu0 0
      %865 = vmatmul.mubr.bf16.gmra.mrb[0].mxu0 %v830
      %v866 = vpop.f32.mrb[0].mxu0
      %v867 = vadd.f32 0.0, %v866
      %v868 = vpop.f32.mrb[0].mxu0
      %v869 = vpop.f32.mrb[0].mxu0
      %v870 = vpop.f32.mrb[0].mxu0
      %871 = vdwg.mxu0
      %v872 = vadd.f32 %v708, %v867
      %v873 = vld [vmem:[%s3] sm:$0x1]
      %v875 = vlaneseq
      %v876 = vshrl.u32 %v875, 7
      %v877 = vsub.s32 0, %v876
      %v878 = vrot.slane %v873, %v877
      %v880 = vadd.f32 %v872, %v878
      %v881 = vld [vmem:[%s208] sm:$0xff]
      %v882 = vadd.f32 %v881, %v880
      %vm883 = vcmask 523264
      %884 = vst.msk [vmem:[%s212] sm:$0xff] %vm883, %v882
      %p885 = scmp.lt.s32.totalorder %s15, 1
      %s886 = scalar_select %p885, %s15, 1
      %s887 = smul.addr %s886, 8
      %s888 = scalar_lea.vmem %s4, %s887
      // Predicated region
      $region37: #{numformer_forward.11} parent=35 // pred_check
        %p889 = pneg %p127
      $region38: #{numformer_forward.11} parent=35 // pred_check_branch
        %891 = sbr.rel (%p889) target = $region40
      $region39: #{numformer_forward.11} parent=35 // pred_region
        _
      $region40: #{numformer_forward.11} parent=35 // pred_fallthru
        _
    $region36: #{numformer_forward.11} parent=5 // pred_fallthru
      _
    %p892 = scmp.le.s32.totalorder 2, %s10
    // Predicated region
    $region41: #{numformer_forward.11} parent=5 // pred_check
      %p893 = pneg %p892
    $region42: #{numformer_forward.11} parent=5 // pred_check_branch
      %895 = sbr.rel (%p893) target = $region44
    $region43: #{numformer_forward.11} parent=5 // pred_region
      %s896 = ssub.s32 %s10, 2
      // Predicated region
      $region45: #{numformer_forward.11} parent=43 // pred_check
        %p897 = pneg %p133
      $region46: #{numformer_forward.11} parent=43 // pred_check_branch
        %899 = sbr.rel (%p897) target = $region48
      $region47: #{numformer_forward.11} parent=43 // pred_region
        %p900 = scmp.lt.s32.totalorder %s16, 1
        %s901 = scalar_select %p900, %s16, 1
        %s902 = smul.addr %s901, 8
        %s903 = scalar_lea.vmem %s4, %s902
      $region48: #{numformer_forward.11} parent=43 // pred_fallthru
        _
    $region44: #{numformer_forward.11} parent=5 // pred_fallthru
      _
  $region6: #{numformer_forward.11} parent=0 // loop_footer
    %s14 = sadd.s32 1, %s10
  $region7: #{numformer_forward.11} parent=0 // loop_footer_branch
    %9 = sbr.rel target = $region3
  $region8: #{numformer_forward.11} parent=0 // loop_exit
    _

// kernel: numformer_forward.12
$region0: #{numformer_forward.12}
  #allocation0 [shape = 'u32[]', space=smem, size = 0x4, offset = 0x4, fixed_abs, tag = 'smem constant byte address 0x4 - core index']
  #allocation1 [shape = 'u32[144,128]{1,0:T(1,128)}', space=vmem, size = 0x12000, scoped, tag = 'internal scratch']
  %s0 = inlined_call_operand.vmem [shape: f32[16,64], index: 0, kind: input, shape index: {}]
  %s1 = inlined_call_operand.vmem [shape: f32[1,64], index: 1, kind: input, shape index: {}]
  %s2 = inlined_call_operand.vmem [shape: f32[1,64], index: 2, kind: input, shape index: {}]
  %s3 = inlined_call_operand.vmem [shape: bf16[64,128], index: 3, kind: input, shape index: {}]
  %s4 = inlined_call_operand.vmem [shape: f32[1,128], index: 4, kind: input, shape index: {}]
  %s5 = inlined_call_operand.vmem [shape: bf16[128,64], index: 5, kind: input, shape index: {}]
  %s6 = inlined_call_operand.vmem [shape: f32[1,64], index: 6, kind: input, shape index: {}]
  %s7 = inlined_call_operand.vmem [shape: f32[16,64], index: 7, kind: output, shape index: {}]
  %s8 = sld [smem:[#allocation0]]
  $region38: #{numformer_forward.12} parent=0
    _
  %s10 = ssub.s32 1, %s8
  %s11 = scalar_select 0, %s10, %s8
  // Predicated region
  $region2: #{numformer_forward.12} parent=0 // pred_check
    _
  $region3: #{numformer_forward.12} parent=0 // pred_check_branch
    %13 = sbr.rel (0) target = $region5
  $region4: #{numformer_forward.12} parent=0 // pred_region
    _
  $region5: #{numformer_forward.12} parent=0 // pred_fallthru
    _
  // Predicated region
  $region6: #{numformer_forward.12} parent=0 // pred_check
    _
  $region7: #{numformer_forward.12} parent=0 // pred_check_branch
    %15 = sbr.rel (0) target = $region9
  $region8: #{numformer_forward.12} parent=0 // pred_region
    _
  $region9: #{numformer_forward.12} parent=0 // pred_fallthru
    _
  // Predicated region
  $region10: #{numformer_forward.12} parent=0 // pred_check
    _
  $region11: #{numformer_forward.12} parent=0 // pred_check_branch
    %17 = sbr.rel (0) target = $region13
  $region12: #{numformer_forward.12} parent=0 // pred_region
    _
  $region13: #{numformer_forward.12} parent=0 // pred_fallthru
    _
  // Predicated region
  $region14: #{numformer_forward.12} parent=0 // pred_check
    _
  $region15: #{numformer_forward.12} parent=0 // pred_check_branch
    %19 = sbr.rel (0) target = $region17
  $region16: #{numformer_forward.12} parent=0 // pred_region
    _
  $region17: #{numformer_forward.12} parent=0 // pred_fallthru
    _
  // Predicated region
  $region18: #{numformer_forward.12} parent=0 // pred_check
    _
  $region19: #{numformer_forward.12} parent=0 // pred_check_branch
    %21 = sbr.rel (0) target = $region21
  $region20: #{numformer_forward.12} parent=0 // pred_region
    _
  $region21: #{numformer_forward.12} parent=0 // pred_fallthru
    _
  // Predicated region
  $region22: #{numformer_forward.12} parent=0 // pred_check
    _
  $region23: #{numformer_forward.12} parent=0 // pred_check_branch
    %23 = sbr.rel (0) target = $region25
  $region24: #{numformer_forward.12} parent=0 // pred_region
    _
  $region25: #{numformer_forward.12} parent=0 // pred_fallthru
    _
  // Predicated region
  $region26: #{numformer_forward.12} parent=0 // pred_check
    _
  $region27: #{numformer_forward.12} parent=0 // pred_check_branch
    %25 = sbr.rel (0) target = $region29
  $region28: #{numformer_forward.12} parent=0 // pred_region
    _
  $region29: #{numformer_forward.12} parent=0 // pred_fallthru
    _
  %v27 = vld [vmem:[%s0] sm:$0xff]
  %v28 = vld [vmem:[%s0 + $0x8] sm:$0xff]
  %v29 = vld [vmem:[%s1] sm:$0x1]
  %v30 = vld [vmem:[%s2] sm:$0x1]
  %vm31 = vcmask 523264
  %v32 = vsel %vm31, %v27, 0.0
  %33 = vadd.xlane.f32.xlu0 %v32
  %v34 = vpop.xlane.xlu0 %33
  %v35 = vsel %vm31, %v28, 0.0
  %36 = vadd.xlane.f32.xlu0 %v35
  %v37 = vpop.xlane.xlu0 %36
  %v38 = vrcp.pop 64.0
  %v39 = vmul.f32 %v34, %v38
  %v40 = vmul.f32 %v37, %v38
  %v41 = vsub.f32 %v27, %v39
  %v42 = vsub.f32 %v28, %v40
  %v43 = vmul.f32 %v41, %v41
  %v44 = vmul.f32 %v42, %v42
  %v45 = vsel %vm31, %v43, 0.0
  %46 = vadd.xlane.f32.xlu0 %v45
  %v47 = vpop.xlane.xlu0 %46
  %v48 = vsel %vm31, %v44, 0.0
  %49 = vadd.xlane.f32.xlu0 %v48
  %v50 = vpop.xlane.xlu0 %49
  %v51 = vmul.f32 %v47, %v38
  %v52 = vmul.f32 %v50, %v38
  %v53 = vadd.f32 %v51, 1e-05
  %v54 = vadd.f32 %v52, 1e-05
  %v55 = vrsqrt.pop %v53
  %v56 = vrsqrt.pop %v54
  %v57 = vmul.f32 %v41, %v55
  %v58 = vmul.f32 %v42, %v56
  %v60 = vlaneseq
  %v61 = vshrl.u32 %v60, 7
  %v62 = vsub.s32 0, %v61
  %v63 = vrot.slane %v29, %v62
  %v65 = vmul.f32 %v57, %v63
  %v66 = vmul.f32 %v58, %v63
  %v68 = vlaneseq
  %v69 = vshrl.u32 %v68, 7
  %v70 = vsub.s32 0, %v69
  %v71 = vrot.slane %v30, %v70
  %v73 = vadd.f32 %v65, %v71
  %v74 = vadd.f32 %v66, %v71
  %v75 = vpack.c.bf16 %v74, %v73
  %v76 = vld [vmem:[%s3] sm:$0xf]
  %v77 = vld [vmem:[%s3 + $0x4] sm:$0xf]
  %v78 = vld [vmem:[%s3 + $0x8] sm:$0xf]
  %v79 = vld [vmem:[%s3 + $0xc] sm:$0xf]
  %v80 = vld [vmem:[%s3 + $0x10] sm:$0xf]
  %v81 = vld [vmem:[%s3 + $0x14] sm:$0xf]
  %v82 = vld [vmem:[%s3 + $0x18] sm:$0xf]
  %v83 = vld [vmem:[%s3 + $0x1c] sm:$0xf]
  %v84 = vld [vmem:[%s4] sm:$0x1]
  %v86 = vlaneseq
  %v87 = vshrl.u32 %v86, 7
  %v88 = vsub.s32 0, %v87
  %v89 = vrot.slane %v84, %v88
  %v99 = vunpack.c.l.b16 %v76
  %v100 = vunpack.c.l.b16 %v77
  %v101 = vunpack.c.l.b16 %v78
  %v102 = vunpack.c.l.b16 %v79
  %v103 = vunpack.c.l.b16 %v80
  %v104 = vunpack.c.l.b16 %v81
  %v105 = vunpack.c.l.b16 %v82
  %v106 = vunpack.c.l.b16 %v83
  %v107 = vpack.c.b16 %v100, %v99
  %v108 = vpack.c.b16 %v102, %v101
  %v109 = vpack.c.b16 %v104, %v103
  %v110 = vpack.c.b16 %v106, %v105
  %v116 = vsel %vm31, %v75, 0
  %118 = vmatprep.subr.bf16.mxu0 0
  %119 = vmatpush1.bf16.msra.mxu0 %v107
  %120 = vmatprep.subr.bf16.mxu0 0
  %121 = vmatpush1.bf16.msra.mxu0 %v108
  %122 = vmatprep.subr.bf16.mxu0 0
  %123 = vmatpush1.bf16.msra.mxu0 %v109
  %124 = vmatprep.subr.bf16.mxu0 0
  %125 = vmatpush1.bf16.msra.mxu0 %v110
  %126 = vmatprep.subr.bf16.mxu0 0
  %127 = vmatpush1.bf16.msra.mxu0 0
  %128 = vmatprep.subr.bf16.mxu0 0
  %129 = vmatpush1.bf16.msra.mxu0 0
  %130 = vmatprep.subr.bf16.mxu0 0
  %131 = vmatpush1.bf16.msra.mxu0 0
  %132 = vmatprep.subr.bf16.mxu0 0
  %133 = vmatpush1.bf16.msra.mxu0 0
  %134 = vmatprep.subr.bf16.mxu0 0
  %135 = vmatpush1.bf16.msra.mxu0 0
  %136 = vmatprep.subr.bf16.mxu0 0
  %137 = vmatpush1.bf16.msra.mxu0 0
  %138 = vmatprep.subr.bf16.mxu0 0
  %139 = vmatpush1.bf16.msra.mxu0 0
  %140 = vmatprep.subr.bf16.mxu0 0
  %141 = vmatpush1.bf16.msra.mxu0 0
  %142 = vmatprep.subr.bf16.mxu0 0
  %143 = vmatpush1.bf16.msra.mxu0 0
  %144 = vmatprep.subr.bf16.mxu0 0
  %145 = vmatpush1.bf16.msra.mxu0 0
  %146 = vmatprep.subr.bf16.mxu0 0
  %147 = vmatpush1.bf16.msra.mxu0 0
  %148 = vmatprep.subr.bf16.mxu0 0
  %149 = vmatpush1.bf16.msra.mxu0 0
  %150 = vmatprep.mubr.bf16.mxu0 0
  %151 = vmatmul.mubr.bf16.gmra.mrb[0].mxu0 %v116
  %v152 = vpop.f32.mrb[0].mxu0
  %v153 = vadd.f32 %v89, %v152
  %v154 = vpop.f32.mrb[0].mxu0
  %v155 = vpop.f32.mrb[0].mxu0
  %v156 = vadd.f32 %v89, %v155
  %v157 = vpop.f32.mrb[0].mxu0
  %158 = vdwg.mxu0
  %v159 = vmul.f32 %v153, 0.5
  %v160 = vmul.f32 %v156, 0.5
  %v161 = vmul.f32 %v153, 0.70710677
  %v162 = vmul.f32 %v156, 0.70710677
  %v163 = verf.f32.pop %v161
  %v164 = verf.f32.pop %v162
  %v165 = vadd.f32 %v163, 1.0
  %v166 = vadd.f32 %v164, 1.0
  %v167 = vmul.f32 %v159, %v165
  %v168 = vmul.f32 %v160, %v166
  %v169 = vpack.c.bf16 %v168, %v167
  %v170 = vld [vmem:[%s5] sm:$0xf]
  %v171 = vld [vmem:[%s5 + $0x4] sm:$0xf]
  %v172 = vld [vmem:[%s5 + $0x8] sm:$0xf]
  %v173 = vld [vmem:[%s5 + $0xc] sm:$0xf]
  %v174 = vld [vmem:[%s5 + $0x10] sm:$0xf]
  %v175 = vld [vmem:[%s5 + $0x14] sm:$0xf]
  %v176 = vld [vmem:[%s5 + $0x18] sm:$0xf]
  %v177 = vld [vmem:[%s5 + $0x1c] sm:$0xf]
  %v178 = vld [vmem:[%s5 + $0x20] sm:$0xf]
  %v179 = vld [vmem:[%s5 + $0x24] sm:$0xf]
  %v180 = vld [vmem:[%s5 + $0x28] sm:$0xf]
  %v181 = vld [vmem:[%s5 + $0x2c] sm:$0xf]
  %v182 = vld [vmem:[%s5 + $0x30] sm:$0xf]
  %v183 = vld [vmem:[%s5 + $0x34] sm:$0xf]
  %v184 = vld [vmem:[%s5 + $0x38] sm:$0xf]
  %v185 = vld [vmem:[%s5 + $0x3c] sm:$0xf]
  %v186 = vld [vmem:[%s6] sm:$0x1]
  %v188 = vlaneseq
  %v189 = vshrl.u32 %v188, 7
  %v190 = vsub.s32 0, %v189
  %v191 = vrot.slane %v186, %v190
  %v209 = vunpack.c.l.b16 %v170
  %v210 = vunpack.c.l.b16 %v171
  %v211 = vunpack.c.l.b16 %v172
  %v212 = vunpack.c.l.b16 %v173
  %v213 = vunpack.c.l.b16 %v174
  %v214 = vunpack.c.l.b16 %v175
  %v215 = vunpack.c.l.b16 %v176
  %v216 = vunpack.c.l.b16 %v177
  %v217 = vunpack.c.l.b16 %v178
  %v218 = vunpack.c.l.b16 %v179
  %v219 = vunpack.c.l.b16 %v180
  %v220 = vunpack.c.l.b16 %v181
  %v221 = vunpack.c.l.b16 %v182
  %v222 = vunpack.c.l.b16 %v183
  %v223 = vunpack.c.l.b16 %v184
  %v224 = vunpack.c.l.b16 %v185
  %v225 = vpack.c.b16 %v210, %v209
  %v226 = vpack.c.b16 %v212, %v211
  %v227 = vpack.c.b16 %v214, %v213
  %v228 = vpack.c.b16 %v216, %v215
  %v229 = vpack.c.b16 %v218, %v217
  %v230 = vpack.c.b16 %v220, %v219
  %v231 = vpack.c.b16 %v222, %v221
  %v232 = vpack.c.b16 %v224, %v223
  %241 = vmatprep.subr.bf16.mxu0 0
  %242 = vmatpush1.bf16.msra.mxu0 %v225
  %243 = vmatprep.subr.bf16.mxu0 0
  %244 = vmatpush1.bf16.msra.mxu0 %v226
  %245 = vmatprep.subr.bf16.mxu0 0
  %246 = vmatpush1.bf16.msra.mxu0 %v227
  %247 = vmatprep.subr.bf16.mxu0 0
  %248 = vmatpush1.bf16.msra.mxu0 %v228
  %249 = vmatprep.subr.bf16.mxu0 0
  %250 = vmatpush1.bf16.msra.mxu0 %v229
  %251 = vmatprep.subr.bf16.mxu0 0
  %252 = vmatpush1.bf16.msra.mxu0 %v230
  %253 = vmatprep.subr.bf16.mxu0 0
  %254 = vmatpush1.bf16.msra.mxu0 %v231
  %255 = vmatprep.subr.bf16.mxu0 0
  %256 = vmatpush1.bf16.msra.mxu0 %v232
  %257 = vmatprep.subr.bf16.mxu0 0
  %258 = vmatpush1.bf16.msra.mxu0 0
  %259 = vmatprep.subr.bf16.mxu0 0
  %260 = vmatpush1.bf16.msra.mxu0 0
  %261 = vmatprep.subr.bf16.mxu0 0
  %262 = vmatpush1.bf16.msra.mxu0 0
  %263 = vmatprep.subr.bf16.mxu0 0
  %264 = vmatpush1.bf16.msra.mxu0 0
  %265 = vmatprep.subr.bf16.mxu0 0
  %266 = vmatpush1.bf16.msra.mxu0 0
  %267 = vmatprep.subr.bf16.mxu0 0
  %268 = vmatpush1.bf16.msra.mxu0 0
  %269 = vmatprep.subr.bf16.mxu0 0
  %270 = vmatpush1.bf16.msra.mxu0 0
  %271 = vmatprep.subr.bf16.mxu0 0
  %272 = vmatpush1.bf16.msra.mxu0 0
  %273 = vmatprep.mubr.bf16.mxu0 0
  %274 = vmatmul.mubr.bf16.gmra.mrb[0].mxu0 %v169
  %v275 = vpop.f32.mrb[0].mxu0
  %v276 = vadd.f32 %v191, %v275
  %v277 = vpop.f32.mrb[0].mxu0
  %v278 = vpop.f32.mrb[0].mxu0
  %v279 = vadd.f32 %v191, %v278
  %v280 = vpop.f32.mrb[0].mxu0
  %281 = vdwg.mxu0
  %v282 = vadd.f32 %v276, %v27
  %v283 = vadd.f32 %v279, %v28
  %284 = vst.msk [vmem:[%s7] sm:$0xff] %vm31, %v282
  %285 = vst.msk [vmem:[%s7 + $0x8] sm:$0xff] %vm31, %v283
  // Predicated region
  $region30: #{numformer_forward.12} parent=0 // pred_check
    _
  $region31: #{numformer_forward.12} parent=0 // pred_check_branch
    %287 = sbr.rel (0) target = $region33
  $region32: #{numformer_forward.12} parent=0 // pred_region
    _
  $region33: #{numformer_forward.12} parent=0 // pred_fallthru
    _
  // Predicated region
  $region34: #{numformer_forward.12} parent=0 // pred_check
    _
  $region35: #{numformer_forward.12} parent=0 // pred_check_branch
    %289 = sbr.rel (0) target = $region37
  $region36: #{numformer_forward.12} parent=0 // pred_region
    _
  $region37: #{numformer_forward.12} parent=0 // pred_fallthru
    _

// kernel: numformer_forward.17
$region0: #{numformer_forward.17}
  #allocation0 [shape = 'u32[]', space=smem, size = 0x4, offset = 0x4, fixed_abs, tag = 'smem constant byte address 0x4 - core index']
  #allocation1 [shape = 'u32[144,128]{1,0:T(1,128)}', space=vmem, size = 0x12000, scoped, tag = 'internal scratch']
  %s0 = inlined_call_operand.vmem [shape: f32[16,64], index: 0, kind: input, shape index: {}]
  %s1 = inlined_call_operand.vmem [shape: bf16[64,128], index: 1, kind: input, shape index: {}]
  %s2 = inlined_call_operand.vmem [shape: f32[1,128], index: 2, kind: input, shape index: {}]
  %s3 = inlined_call_operand.vmem [shape: bf16[128,128], index: 3, kind: input, shape index: {}]
  %s4 = inlined_call_operand.vmem [shape: f32[1,128], index: 4, kind: input, shape index: {}]
  %s5 = inlined_call_operand.vmem [shape: f32[16,128], index: 5, kind: output, shape index: {}]
  %s6 = sld [smem:[#allocation0]]
  $region30: #{numformer_forward.17} parent=0
    _
  %s8 = ssub.s32 1, %s6
  %s9 = scalar_select 0, %s8, %s6
  // Predicated region
  $region2: #{numformer_forward.17} parent=0 // pred_check
    _
  $region3: #{numformer_forward.17} parent=0 // pred_check_branch
    %11 = sbr.rel (0) target = $region5
  $region4: #{numformer_forward.17} parent=0 // pred_region
    _
  $region5: #{numformer_forward.17} parent=0 // pred_fallthru
    _
  // Predicated region
  $region6: #{numformer_forward.17} parent=0 // pred_check
    _
  $region7: #{numformer_forward.17} parent=0 // pred_check_branch
    %13 = sbr.rel (0) target = $region9
  $region8: #{numformer_forward.17} parent=0 // pred_region
    _
  $region9: #{numformer_forward.17} parent=0 // pred_fallthru
    _
  // Predicated region
  $region10: #{numformer_forward.17} parent=0 // pred_check
    _
  $region11: #{numformer_forward.17} parent=0 // pred_check_branch
    %15 = sbr.rel (0) target = $region13
  $region12: #{numformer_forward.17} parent=0 // pred_region
    _
  $region13: #{numformer_forward.17} parent=0 // pred_fallthru
    _
  // Predicated region
  $region14: #{numformer_forward.17} parent=0 // pred_check
    _
  $region15: #{numformer_forward.17} parent=0 // pred_check_branch
    %17 = sbr.rel (0) target = $region17
  $region16: #{numformer_forward.17} parent=0 // pred_region
    _
  $region17: #{numformer_forward.17} parent=0 // pred_fallthru
    _
  // Predicated region
  $region18: #{numformer_forward.17} parent=0 // pred_check
    _
  $region19: #{numformer_forward.17} parent=0 // pred_check_branch
    %19 = sbr.rel (0) target = $region21
  $region20: #{numformer_forward.17} parent=0 // pred_region
    _
  $region21: #{numformer_forward.17} parent=0 // pred_fallthru
    _
  %v21 = vld [vmem:[%s0] sm:$0xff]
  %v22 = vld [vmem:[%s0 + $0x8] sm:$0xff]
  %v23 = vpack.c.bf16 %v22, %v21
  %v24 = vld [vmem:[%s1] sm:$0xf]
  %v25 = vld [vmem:[%s1 + $0x4] sm:$0xf]
  %v26 = vld [vmem:[%s1 + $0x8] sm:$0xf]
  %v27 = vld [vmem:[%s1 + $0xc] sm:$0xf]
  %v28 = vld [vmem:[%s1 + $0x10] sm:$0xf]
  %v29 = vld [vmem:[%s1 + $0x14] sm:$0xf]
  %v30 = vld [vmem:[%s1 + $0x18] sm:$0xf]
  %v31 = vld [vmem:[%s1 + $0x1c] sm:$0xf]
  %v32 = vld [vmem:[%s2] sm:$0x1]
  %v34 = vlaneseq
  %v35 = vshrl.u32 %v34, 7
  %v36 = vsub.s32 0, %v35
  %v37 = vrot.slane %v32, %v36
  %v47 = vunpack.c.l.b16 %v24
  %v48 = vunpack.c.l.b16 %v25
  %v49 = vunpack.c.l.b16 %v26
  %v50 = vunpack.c.l.b16 %v27
  %v51 = vunpack.c.l.b16 %v28
  %v52 = vunpack.c.l.b16 %v29
  %v53 = vunpack.c.l.b16 %v30
  %v54 = vunpack.c.l.b16 %v31
  %v55 = vpack.c.b16 %v48, %v47
  %v56 = vpack.c.b16 %v50, %v49
  %v57 = vpack.c.b16 %v52, %v51
  %v58 = vpack.c.b16 %v54, %v53
  %vm63 = vcmask 523264
  %v65 = vsel %vm63, %v23, 0
  %67 = vmatprep.subr.bf16.mxu0 0
  %68 = vmatpush1.bf16.msra.mxu0 %v55
  %69 = vmatprep.subr.bf16.mxu0 0
  %70 = vmatpush1.bf16.msra.mxu0 %v56
  %71 = vmatprep.subr.bf16.mxu0 0
  %72 = vmatpush1.bf16.msra.mxu0 %v57
  %73 = vmatprep.subr.bf16.mxu0 0
  %74 = vmatpush1.bf16.msra.mxu0 %v58
  %75 = vmatprep.subr.bf16.mxu0 0
  %76 = vmatpush1.bf16.msra.mxu0 0
  %77 = vmatprep.subr.bf16.mxu0 0
  %78 = vmatpush1.bf16.msra.mxu0 0
  %79 = vmatprep.subr.bf16.mxu0 0
  %80 = vmatpush1.bf16.msra.mxu0 0
  %81 = vmatprep.subr.bf16.mxu0 0
  %82 = vmatpush1.bf16.msra.mxu0 0
  %83 = vmatprep.subr.bf16.mxu0 0
  %84 = vmatpush1.bf16.msra.mxu0 0
  %85 = vmatprep.subr.bf16.mxu0 0
  %86 = vmatpush1.bf16.msra.mxu0 0
  %87 = vmatprep.subr.bf16.mxu0 0
  %88 = vmatpush1.bf16.msra.mxu0 0
  %89 = vmatprep.subr.bf16.mxu0 0
  %90 = vmatpush1.bf16.msra.mxu0 0
  %91 = vmatprep.subr.bf16.mxu0 0
  %92 = vmatpush1.bf16.msra.mxu0 0
  %93 = vmatprep.subr.bf16.mxu0 0
  %94 = vmatpush1.bf16.msra.mxu0 0
  %95 = vmatprep.subr.bf16.mxu0 0
  %96 = vmatpush1.bf16.msra.mxu0 0
  %97 = vmatprep.subr.bf16.mxu0 0
  %98 = vmatpush1.bf16.msra.mxu0 0
  %99 = vmatprep.mubr.bf16.mxu0 0
  %100 = vmatmul.mubr.bf16.gmra.mrb[0].mxu0 %v65
  %v101 = vpop.f32.mrb[0].mxu0
  %v102 = vadd.f32 %v37, %v101
  %v103 = vpop.f32.mrb[0].mxu0
  %v104 = vpop.f32.mrb[0].mxu0
  %v105 = vadd.f32 %v37, %v104
  %v106 = vpop.f32.mrb[0].mxu0
  %107 = vdwg.mxu0
  %v108 = vmul.f32 %v102, 0.5
  %v109 = vmul.f32 %v105, 0.5
  %v110 = vmul.f32 %v102, 0.70710677
  %v111 = vmul.f32 %v105, 0.70710677
  %v112 = verf.f32.pop %v110
  %v113 = verf.f32.pop %v111
  %v114 = vadd.f32 %v112, 1.0
  %v115 = vadd.f32 %v113, 1.0
  %v116 = vmul.f32 %v108, %v114
  %v117 = vmul.f32 %v109, %v115
  %v118 = vpack.c.bf16 %v117, %v116
  %v119 = vld [vmem:[%s3] sm:$0xf]
  %v120 = vld [vmem:[%s3 + $0x4] sm:$0xf]
  %v121 = vld [vmem:[%s3 + $0x8] sm:$0xf]
  %v122 = vld [vmem:[%s3 + $0xc] sm:$0xf]
  %v123 = vld [vmem:[%s3 + $0x10] sm:$0xf]
  %v124 = vld [vmem:[%s3 + $0x14] sm:$0xf]
  %v125 = vld [vmem:[%s3 + $0x18] sm:$0xf]
  %v126 = vld [vmem:[%s3 + $0x1c] sm:$0xf]
  %v127 = vld [vmem:[%s3 + $0x20] sm:$0xf]
  %v128 = vld [vmem:[%s3 + $0x24] sm:$0xf]
  %v129 = vld [vmem:[%s3 + $0x28] sm:$0xf]
  %v130 = vld [vmem:[%s3 + $0x2c] sm:$0xf]
  %v131 = vld [vmem:[%s3 + $0x30] sm:$0xf]
  %v132 = vld [vmem:[%s3 + $0x34] sm:$0xf]
  %v133 = vld [vmem:[%s3 + $0x38] sm:$0xf]
  %v134 = vld [vmem:[%s3 + $0x3c] sm:$0xf]
  %v135 = vld [vmem:[%s4] sm:$0x1]
  %v137 = vlaneseq
  %v138 = vshrl.u32 %v137, 7
  %v139 = vsub.s32 0, %v138
  %v140 = vrot.slane %v135, %v139
  %v158 = vunpack.c.l.b16 %v119
  %v159 = vunpack.c.l.b16 %v120
  %v160 = vunpack.c.l.b16 %v121
  %v161 = vunpack.c.l.b16 %v122
  %v162 = vunpack.c.l.b16 %v123
  %v163 = vunpack.c.l.b16 %v124
  %v164 = vunpack.c.l.b16 %v125
  %v165 = vunpack.c.l.b16 %v126
  %v166 = vunpack.c.l.b16 %v127
  %v167 = vunpack.c.l.b16 %v128
  %v168 = vunpack.c.l.b16 %v129
  %v169 = vunpack.c.l.b16 %v130
  %v170 = vunpack.c.l.b16 %v131
  %v171 = vunpack.c.l.b16 %v132
  %v172 = vunpack.c.l.b16 %v133
  %v173 = vunpack.c.l.b16 %v134
  %v174 = vpack.c.b16 %v159, %v158
  %v175 = vpack.c.b16 %v161, %v160
  %v176 = vpack.c.b16 %v163, %v162
  %v177 = vpack.c.b16 %v165, %v164
  %v178 = vpack.c.b16 %v167, %v166
  %v179 = vpack.c.b16 %v169, %v168
  %v180 = vpack.c.b16 %v171, %v170
  %v181 = vpack.c.b16 %v173, %v172
  %190 = vmatprep.subr.bf16.mxu0 0
  %191 = vmatpush1.bf16.msra.mxu0 %v174
  %192 = vmatprep.subr.bf16.mxu0 0
  %193 = vmatpush1.bf16.msra.mxu0 %v175
  %194 = vmatprep.subr.bf16.mxu0 0
  %195 = vmatpush1.bf16.msra.mxu0 %v176
  %196 = vmatprep.subr.bf16.mxu0 0
  %197 = vmatpush1.bf16.msra.mxu0 %v177
  %198 = vmatprep.subr.bf16.mxu0 0
  %199 = vmatpush1.bf16.msra.mxu0 %v178
  %200 = vmatprep.subr.bf16.mxu0 0
  %201 = vmatpush1.bf16.msra.mxu0 %v179
  %202 = vmatprep.subr.bf16.mxu0 0
  %203 = vmatpush1.bf16.msra.mxu0 %v180
  %204 = vmatprep.subr.bf16.mxu0 0
  %205 = vmatpush1.bf16.msra.mxu0 %v181
  %206 = vmatprep.subr.bf16.mxu0 0
  %207 = vmatpush1.bf16.msra.mxu0 0
  %208 = vmatprep.subr.bf16.mxu0 0
  %209 = vmatpush1.bf16.msra.mxu0 0
  %210 = vmatprep.subr.bf16.mxu0 0
  %211 = vmatpush1.bf16.msra.mxu0 0
  %212 = vmatprep.subr.bf16.mxu0 0
  %213 = vmatpush1.bf16.msra.mxu0 0
  %214 = vmatprep.subr.bf16.mxu0 0
  %215 = vmatpush1.bf16.msra.mxu0 0
  %216 = vmatprep.subr.bf16.mxu0 0
  %217 = vmatpush1.bf16.msra.mxu0 0
  %218 = vmatprep.subr.bf16.mxu0 0
  %219 = vmatpush1.bf16.msra.mxu0 0
  %220 = vmatprep.subr.bf16.mxu0 0
  %221 = vmatpush1.bf16.msra.mxu0 0
  %222 = vmatprep.mubr.bf16.mxu0 0
  %223 = vmatmul.mubr.bf16.gmra.mrb[0].mxu0 %v118
  %v224 = vpop.f32.mrb[0].mxu0
  %v225 = vadd.f32 %v140, %v224
  %v226 = vpop.f32.mrb[0].mxu0
  %v227 = vpop.f32.mrb[0].mxu0
  %v228 = vadd.f32 %v140, %v227
  %v229 = vpop.f32.mrb[0].mxu0
  %230 = vdwg.mxu0
  %231 = vst [vmem:[%s5] sm:$0xff] %v225
  %232 = vst [vmem:[%s5 + $0x8] sm:$0xff] %v228
  // Predicated region
  $region22: #{numformer_forward.17} parent=0 // pred_check
    _
  $region23: #{numformer_forward.17} parent=0 // pred_check_branch
    %234 = sbr.rel (0) target = $region25
  $region24: #{numformer_forward.17} parent=0 // pred_region
    _
  $region25: #{numformer_forward.17} parent=0 // pred_fallthru
    _
  // Predicated region
  $region26: #{numformer_forward.17} parent=0 // pred_check
    _
  $region27: #{numformer_forward.17} parent=0 // pred_check_branch
    %236 = sbr.rel (0) target = $region29
  $region28: #{numformer_forward.17} parent=0 // pred_region
    _
  $region29: #{numformer_forward.17} parent=0 // pred_fallthru
    _

</llo_original>
